<compile_context>
chip_gen: v6e
topology: v6e:2x2x1
jax: 0.10.0
libtpu: 0.0.40
codegen_flags: <defaults>
</compile_context>

<pallas_src>
import functools

import jax
import jax.numpy as jnp
from jax import lax
from jax.experimental import pallas as pl
from jax.experimental.pallas import tpu as pltpu


def _leaky(v, slope=0.01):
    return jnp.where(v >= 0, v, slope * v)


def _inverted_residual_kernel(x_ref, s1_ref, b1_ref, w1_ref, b2_ref, wdw_ref,
                              rowsel_ref, b3_ref, w3_ref, o_ref, g_ref,
                              *, use_res, d_lanes, mrows):
    x0 = x_ref[...].astype(jnp.float32)                      # (Nb*H, W*Cin)

    # --- ABN #1 (affine + LeakyReLU) at full VPU width ---
    x1 = _leaky(x0 * s1_ref[0] + b1_ref[0])

    # --- 1x1 expand conv: ONE block-diagonal MXU matmul (ABN#2 scale folded
    #     into the weights), then ABN#2 bias + LeakyReLU. ---
    t1 = _leaky(jnp.dot(x1, w1_ref[...], preferred_element_type=jnp.float32)
                + b2_ref[0])                                 # (Nb*H, W*Chid)

    # --- +-dilate horizontal taps derived from the single expand result:
    #     shift along the lane axis by dilate*Chid lanes with zero fill at the
    #     image border.  The per-channel bias and LeakyReLU commute with a
    #     whole-pixel shift, so shifting the post-activation tensor is exact;
    #     the zero fill reproduces the conv's horizontal zero padding. ---
    L = t1.shape[-1]
    z = jnp.zeros((mrows, d_lanes), jnp.float32)
    tap_m = jnp.concatenate([z, t1[:, :L - d_lanes]], axis=-1)   # hidden[q - d]
    tap_p = jnp.concatenate([t1[:, d_lanes:], z], axis=-1)       # hidden[q + d]

    # --- depthwise 3x3, horizontal part (ABN#3 scale folded into the taps):
    #     9 lane-dense VPU FMAs, each ky result written straight to the VMEM
    #     scratch (keeps vreg pressure low; no in-vreg accumulator). ---
    for ky in range(3):
        g_ref[pl.ds(ky * mrows, mrows), :] = (
            tap_m * wdw_ref[ky * 3 + 0] +
            t1 * wdw_ref[ky * 3 + 1] +
            tap_p * wdw_ref[ky * 3 + 2])

    # --- depthwise vertical shift + zero pad + stride row-subsample: a single
    #     merged row-selection matmul with K = 3*Nb*H (instead of 3 slivers). ---
    acc = jnp.dot(rowsel_ref[...], g_ref[...],
                  preferred_element_type=jnp.float32)        # (Nb*Hout, W*Chid)

    # --- ABN#3 bias + LeakyReLU, then 1x1 projection (stride column-subsample
    #     folded into the block-diagonal projection weights). ---
    h3 = _leaky(acc + b3_ref[0])
    out = jnp.dot(h3, w3_ref[...], preferred_element_type=jnp.float32)

    if use_res:                                              # stride==1 and inp==oup
        out = out + x0
    o_ref[...] = out.astype(o_ref.dtype)                     # lane-dense store


def _pick_batch_block(n, h, target_rows=128):
    """Images per grid block: aim for >= target_rows matmul rows, but keep >= 2
    grid steps when N allows so both v7x TensorCores get work."""
    nb = max(1, min(n, -(-target_rows // h)))
    while nb > 1 and (n % nb != 0 or n // nb < 2):
        nb -= 1
    return nb


def prepare_inverted_residual(params, *, N, H, W, stride, dilate):
    """One-time (per layer) weight preparation: fold ABN scales, build the
    lane-dense block-diagonal / row-selection matrices.  Hoisted out of the
    per-call path so its HBM cost is amortized across forward calls."""
    (s1, b1, w1, s2, b2, wdw, s3, b3, w3) = params
    Cin, Chid = w1.shape
    Cout = w3.shape[1]
    Hout = (H - 1) // stride + 1
    Wout = (W - 1) // stride + 1
    use_res = (stride == 1) and (Cin == Cout)
    nb = _pick_batch_block(N, H)
    f32 = jnp.float32

    tile = lambda v, reps: jnp.tile(v.reshape(-1), reps)[None, :]
    s1t = tile(s1, W)                                        # (1, W*Cin)
    b1t = tile(b1, W)                                        # (1, W*Cin)
    b2t = tile(b2, W)                                        # (1, W*Chid)
    b3t = tile(b3, W)                                        # (1, W*Chid)

    wi = jnp.arange(W)

    # Center-tap 1x1 expand as a block-diagonal (W*Cin, W*Chid) matrix with the
    # ABN#2 scale folded in (single copy; shifted taps are derived in-kernel).
    w1s = w1 * s2.reshape(1, Chid)
    w1bd = jnp.einsum('pq,ij->piqj', jnp.eye(W, dtype=f32), w1s
                      ).reshape(W * Cin, W * Chid)

    # Depthwise taps with ABN#3 scale folded in, tiled across W (lane-dense).
    wdwt = jnp.tile(wdw * s3.reshape(1, Chid), (1, W))       # (9, W*Chid)

    # Merged vertical row-selection matrix: block-diagonal over the nb images
    # in a block, three ky taps stacked along K -> (nb*Hout, 3*nb*H).
    ho = jnp.arange(Hout)[:, None]
    hi = jnp.arange(H)[None, :]
    eye_nb = jnp.eye(nb, dtype=f32)
    rowsel = jnp.concatenate(
        [jnp.kron(eye_nb, (hi == stride * ho + (ky - 1) * dilate).astype(f32))
         for ky in range(3)], axis=1)                        # (nb*Hout, 3*nb*H)

    # 1x1 projection with the stride column-subsample folded in.
    w3bd = jnp.einsum('pq,ij->piqj',
                      (wi[:, None] == stride * jnp.arange(Wout)[None, :]).astype(f32),
                      w3).reshape(W * Chid, Wout * Cout)     # (W*Chid, Wout*Cout)

    arrays = (s1t, b1t, w1bd, b2t, wdwt, rowsel, b3t, w3bd)
    meta = dict(N=N, H=H, W=W, Cin=Cin, Chid=Chid, Cout=Cout,
                Hout=Hout, Wout=Wout, stride=stride, dilate=dilate,
                nb=nb, use_res=use_res)
    return arrays, meta


def inverted_residual_iabn(x_nchw, prepared):
    """x_nchw: (N, Cin, H, W) float32 -> (N, Cout, Hout, Wout). Eval mode."""
    arrays, m = prepared
    (s1t, b1t, w1bd, b2t, wdwt, rowsel, b3t, w3bd) = arrays
    N, H, W = m["N"], m["H"], m["W"]
    Cin, Chid, Cout = m["Cin"], m["Chid"], m["Cout"]
    Hout, Wout, nb = m["Hout"], m["Wout"], m["nb"]
    assert x_nchw.shape == (N, Cin, H, W)

    mrows = nb * H
    # Lane-dense input with batch folded into the matmul M dimension.
    x2 = jnp.transpose(x_nchw, (0, 2, 3, 1)).reshape(N * H, W * Cin)

    kernel = functools.partial(_inverted_residual_kernel,
                               use_res=m["use_res"],
                               d_lanes=m["dilate"] * Chid,
                               mrows=mrows)

    def const_spec(a):                       # full-array, constant index_map
        return pl.BlockSpec(a.shape, lambda b: (0,) * a.ndim)

    out = pl.pallas_call(
        kernel,
        out_shape=jax.ShapeDtypeStruct((N * Hout, Wout * Cout), x_nchw.dtype),
        grid_spec=pltpu.PrefetchScalarGridSpec(
            num_scalar_prefetch=0,
            grid=(N // nb,),
            in_specs=[
                pl.BlockSpec((mrows, W * Cin), lambda b: (b, 0)),
                const_spec(s1t), const_spec(b1t), const_spec(w1bd),
                const_spec(b2t), const_spec(wdwt), const_spec(rowsel),
                const_spec(b3t), const_spec(w3bd),
            ],
            out_specs=pl.BlockSpec((nb * Hout, Wout * Cout), lambda b: (b, 0)),
            scratch_shapes=[pltpu.VMEM((3 * mrows, W * Chid), jnp.float32)],
        ),
        compiler_params=pltpu.CompilerParams(
            dimension_semantics=("parallel",),        # shard batch blocks over TCs
            vmem_limit_bytes=32 * 1024 * 1024),
    )(x2, s1t, b1t, w1bd, b2t, wdwt, rowsel, b3t, w3bd)

    out = out.reshape(N, Hout, Wout, Cout)
    return jnp.transpose(out, (0, 3, 1, 2))                  # NHWC -> NCHW


def make_params(key, inp, oup, expand_ratio):
    """Deterministic synthetic parameters with PyTorch-equivalent shapes."""
    hid = inp * expand_ratio
    keys = jax.random.split(key, 6)

    def abn(k, c):
        kg, kb, km, kv = jax.random.split(k, 4)
        gamma = jax.random.uniform(kg, (c,), jnp.float32, 0.8, 1.2)
        beta = 0.1 * jax.random.normal(kb, (c,), jnp.float32)
        mean = 0.1 * jax.random.normal(km, (c,), jnp.float32)
        var = jax.random.uniform(kv, (c,), jnp.float32, 0.5, 1.5)
        scale = gamma * lax.rsqrt(var + 1e-5)
        shift = beta - mean * scale
        return scale.reshape(1, c), shift.reshape(1, c)

    s1, b1 = abn(keys[0], inp)
    s2, b2 = abn(keys[1], hid)
    s3, b3 = abn(keys[2], hid)

    # PyTorch Conv2d weight layouts -> kernel-friendly layouts
    w1_pt = 0.1 * jax.random.normal(keys[3], (hid, inp, 1, 1), jnp.float32)
    wdw_pt = 0.1 * jax.random.normal(keys[4], (hid, 1, 3, 3), jnp.float32)
    w3_pt = 0.1 * jax.random.normal(keys[5], (oup, hid, 1, 1), jnp.float32)

    w1 = jnp.transpose(w1_pt[:, :, 0, 0], (1, 0))                    # (Cin, Chid)
    wdw = jnp.transpose(wdw_pt[:, 0], (1, 2, 0)).reshape(9, hid)     # (9, Chid)
    w3 = jnp.transpose(w3_pt[:, :, 0, 0], (1, 0))                    # (Chid, Cout)
    return (s1, b1, w1, s2, b2, wdw, s3, b3, w3)


def ref_forward(x_nchw, params, *, stride, dilate):
    """Pure-JAX reference (matches the PyTorch forward in eval mode)."""
    (s1, b1, w1, s2, b2, wdw, s3, b3, w3) = params
    N, Cin, H, W = x_nchw.shape
    Chid = w1.shape[1]
    Cout = w3.shape[1]
    use_res = (stride == 1) and (Cin == Cout)

    x = jnp.transpose(x_nchw, (0, 2, 3, 1))
    leaky = lambda v: jnp.where(v >= 0, v, 0.01 * v)

    h = leaky(x * s1[0] + b1[0])
    h = jnp.einsum('nhwi,io->nhwo', h, w1, precision=lax.Precision.HIGHEST)
    h = leaky(h * s2[0] + b2[0])

    dwk = wdw.reshape(3, 3, Chid)[:, :, None, :]  # HWIO for depthwise
    h = lax.conv_general_dilated(h, dwk,
                                 window_strides=(stride, stride),
                                 padding=[(dilate, dilate), (dilate, dilate)],
                                 rhs_dilation=(dilate, dilate),
                                 dimension_numbers=('NHWC', 'HWIO', 'NHWC'),
                                 feature_group_count=Chid,
                                 precision=lax.Precision.HIGHEST)
    h = leaky(h * s3[0] + b3[0])
    out = jnp.einsum('nhwc,co->nhwo', h, w3, precision=lax.Precision.HIGHEST)
    if use_res:
        out = out + x
    return jnp.transpose(out, (0, 3, 1, 2))


if __name__ == "__main__":
    key = jax.random.PRNGKey(0)

    configs = [
        # (inp, oup, stride, dilate, expand_ratio, N, H, W)
        (8, 8, 1, 1, 6, 2, 16, 16),    # residual block (stride 1, inp == oup)
        (8, 16, 2, 2, 6, 2, 16, 16),   # strided + dilated block, no residual
    ]
    for idx, (inp, oup, stride, dilate, expand, N, H, W) in enumerate(configs):
        kx_, kp_ = jax.random.split(jax.random.fold_in(key, idx))
        x = jax.random.normal(kx_, (N, inp, H, W), jnp.float32)
        params = make_params(kp_, inp, oup, expand)

        # One-time per-layer weight prep (hoisted out of the per-call path).
        prepared = prepare_inverted_residual(params, N=N, H=H, W=W,
                                             stride=stride, dilate=dilate)

        y = inverted_residual_iabn(x, prepared)
        y = jax.block_until_ready(y)

        y_ref = ref_forward(x, params, stride=stride, dilate=dilate)
        assert y.shape == y_ref.shape, (y.shape, y_ref.shape)
        max_err = float(jnp.max(jnp.abs(y - y_ref)))
        if not (max_err < 2e-3):
            raise AssertionError(
                f"config {idx}: mismatch vs reference, max abs err = {max_err}")

    print("KERNEL_OK")
</pallas_src>

<mosaic_0001>
module attributes {stable_mosaic.version = 11 : i64} {
  func.func @_inverted_residual_kernel(%arg0: i32, %arg1: memref<16x128xf32, #tpu.memory_space<vmem>>, %arg2: memref<1x128xf32, #tpu.memory_space<vmem>>, %arg3: memref<1x128xf32, #tpu.memory_space<vmem>>, %arg4: memref<128x768xf32, #tpu.memory_space<vmem>>, %arg5: memref<1x768xf32, #tpu.memory_space<vmem>>, %arg6: memref<9x768xf32, #tpu.memory_space<vmem>>, %arg7: memref<16x48xf32, #tpu.memory_space<vmem>>, %arg8: memref<1x768xf32, #tpu.memory_space<vmem>>, %arg9: memref<768x128xf32, #tpu.memory_space<vmem>>, %arg10: memref<16x128xf32, #tpu.memory_space<vmem>>, %arg11: memref<48x768xf32, #tpu.memory_space<vmem>>) attributes {dimension_semantics = [#tpu.dimension_semantics<parallel>], iteration_bounds = array<i64: 2>, scalar_prefetch = 0 : i64, scratch_operands = 1 : i64, tpu.core_type = #tpu.core_type<tc>, window_params = [{transform_indices = @transform_0, window_bounds = array<i64: 16, 128>}, {pipeline_mode = #tpu.pipeline_mode<synchronous>, transform_indices = @transform_1, window_bounds = array<i64: 1, 128>}, {pipeline_mode = #tpu.pipeline_mode<synchronous>, transform_indices = @transform_2, window_bounds = array<i64: 1, 128>}, {pipeline_mode = #tpu.pipeline_mode<synchronous>, transform_indices = @transform_3, window_bounds = array<i64: 128, 768>}, {pipeline_mode = #tpu.pipeline_mode<synchronous>, transform_indices = @transform_4, window_bounds = array<i64: 1, 768>}, {pipeline_mode = #tpu.pipeline_mode<synchronous>, transform_indices = @transform_5, window_bounds = array<i64: 9, 768>}, {pipeline_mode = #tpu.pipeline_mode<synchronous>, transform_indices = @transform_6, window_bounds = array<i64: 16, 48>}, {pipeline_mode = #tpu.pipeline_mode<synchronous>, transform_indices = @transform_7, window_bounds = array<i64: 1, 768>}, {pipeline_mode = #tpu.pipeline_mode<synchronous>, transform_indices = @transform_8, window_bounds = array<i64: 768, 128>}, {transform_indices = @transform_9, window_bounds = array<i64: 16, 128>}]} {
    %c0 = arith.constant 0 : index
    %c0_0 = arith.constant 0 : index
    %0 = vector.load %arg1[%c0, %c0_0] : memref<16x128xf32, #tpu.memory_space<vmem>>, vector<16x128xf32>
    %c0_1 = arith.constant 0 : index
    %c0_2 = arith.constant 0 : index
    %1 = vector.load %arg2[%c0_1, %c0_2] : memref<1x128xf32, #tpu.memory_space<vmem>>, vector<1x128xf32>
    %2 = vector.shape_cast %1 : vector<1x128xf32> to vector<128xf32>
    %3 = vector.shape_cast %2 : vector<128xf32> to vector<1x128xf32>
    %4 = vector.broadcast %3 : vector<1x128xf32> to vector<16x128xf32>
    %5 = arith.mulf %0, %4 : vector<16x128xf32>
    %c0_3 = arith.constant 0 : index
    %c0_4 = arith.constant 0 : index
    %6 = vector.load %arg3[%c0_3, %c0_4] : memref<1x128xf32, #tpu.memory_space<vmem>>, vector<1x128xf32>
    %7 = vector.shape_cast %6 : vector<1x128xf32> to vector<128xf32>
    %8 = vector.shape_cast %7 : vector<128xf32> to vector<1x128xf32>
    %9 = vector.broadcast %8 : vector<1x128xf32> to vector<16x128xf32>
    %10 = arith.addf %5, %9 : vector<16x128xf32>
    %cst = arith.constant 0.000000e+00 : f32
    %11 = vector.broadcast %cst : f32 to vector<16x128xf32>
    %12 = arith.cmpf oge, %10, %11 : vector<16x128xf32>
    %cst_5 = arith.constant 0.00999999977 : f32
    %13 = vector.broadcast %cst_5 : f32 to vector<16x128xf32>
    %14 = arith.mulf %13, %10 : vector<16x128xf32>
    %15 = arith.select %12, %10, %14 : vector<16x128xi1>, vector<16x128xf32>
    %c0_6 = arith.constant 0 : index
    %c0_7 = arith.constant 0 : index
    %16 = vector.load %arg4[%c0_6, %c0_7] : memref<128x768xf32, #tpu.memory_space<vmem>>, vector<128x768xf32>
    %cst_8 = arith.constant dense<0.000000e+00> : vector<16x768xf32>
    %17 = tpu.matmul %15, %16, %cst_8 {dimension_numbers = #tpu.dot_dimension_numbers<[1], [0], [0], [1], [0, 0, 1, 1], [], []>} : vector<16x128xf32>, vector<128x768xf32>, vector<16x768xf32> -> vector<16x768xf32>
    %c0_9 = arith.constant 0 : index
    %c0_10 = arith.constant 0 : index
    %18 = vector.load %arg5[%c0_9, %c0_10] : memref<1x768xf32, #tpu.memory_space<vmem>>, vector<1x768xf32>
    %19 = vector.shape_cast %18 : vector<1x768xf32> to vector<768xf32>
    %20 = vector.shape_cast %19 : vector<768xf32> to vector<1x768xf32>
    %21 = vector.broadcast %20 : vector<1x768xf32> to vector<16x768xf32>
    %22 = arith.addf %17, %21 : vector<16x768xf32>
    %cst_11 = arith.constant 0.000000e+00 : f32
    %23 = vector.broadcast %cst_11 : f32 to vector<16x768xf32>
    %24 = arith.cmpf oge, %22, %23 : vector<16x768xf32>
    %cst_12 = arith.constant 0.00999999977 : f32
    %25 = vector.broadcast %cst_12 : f32 to vector<16x768xf32>
    %26 = arith.mulf %25, %22 : vector<16x768xf32>
    %27 = arith.select %24, %22, %26 : vector<16x768xi1>, vector<16x768xf32>
    %cst_13 = arith.constant 0.000000e+00 : f32
    %28 = vector.broadcast %cst_13 : f32 to vector<16x48xf32>
    %29 = vector.extract_strided_slice %27 {offsets = [0, 0], sizes = [16, 720], strides = [1, 1]} : vector<16x768xf32> to vector<16x720xf32>
    %30 = tpu.concatenate %28, %29 in 1 : vector<16x48xf32>, vector<16x720xf32> -> vector<16x768xf32>
    %31 = vector.extract_strided_slice %27 {offsets = [0, 48], sizes = [16, 720], strides = [1, 1]} : vector<16x768xf32> to vector<16x720xf32>
    %32 = tpu.concatenate %31, %28 in 1 : vector<16x720xf32>, vector<16x48xf32> -> vector<16x768xf32>
    %c0_14 = arith.constant 0 : index
    %c0_15 = arith.constant 0 : index
    %33 = vector.load %arg6[%c0_14, %c0_15] : memref<9x768xf32, #tpu.memory_space<vmem>>, vector<1x768xf32>
    %34 = vector.shape_cast %33 : vector<1x768xf32> to vector<768xf32>
    %35 = vector.shape_cast %34 : vector<768xf32> to vector<1x768xf32>
    %36 = vector.broadcast %35 : vector<1x768xf32> to vector<16x768xf32>
    %37 = arith.mulf %30, %36 : vector<16x768xf32>
    %c1 = arith.constant 1 : index
    %c0_16 = arith.constant 0 : index
    %38 = vector.load %arg6[%c1, %c0_16] : memref<9x768xf32, #tpu.memory_space<vmem>>, vector<1x768xf32>
    %39 = vector.shape_cast %38 : vector<1x768xf32> to vector<768xf32>
    %40 = vector.shape_cast %39 : vector<768xf32> to vector<1x768xf32>
    %41 = vector.broadcast %40 : vector<1x768xf32> to vector<16x768xf32>
    %42 = arith.mulf %27, %41 : vector<16x768xf32>
    %43 = arith.addf %37, %42 : vector<16x768xf32>
    %c2 = arith.constant 2 : index
    %c0_17 = arith.constant 0 : index
    %44 = vector.load %arg6[%c2, %c0_17] : memref<9x768xf32, #tpu.memory_space<vmem>>, vector<1x768xf32>
    %45 = vector.shape_cast %44 : vector<1x768xf32> to vector<768xf32>
    %46 = vector.shape_cast %45 : vector<768xf32> to vector<1x768xf32>
    %47 = vector.broadcast %46 : vector<1x768xf32> to vector<16x768xf32>
    %48 = arith.mulf %32, %47 : vector<16x768xf32>
    %49 = arith.addf %43, %48 : vector<16x768xf32>
    %c0_18 = arith.constant 0 : index
    %c0_19 = arith.constant 0 : index
    %50 = vector.load %arg11[%c0_18, %c0_19] : memref<48x768xf32, #tpu.memory_space<vmem>>, vector<16x768xf32>
    tpu.vector_store %arg11[%c0_18, %c0_19], %49 {strides = array<i32>} : memref<48x768xf32, #tpu.memory_space<vmem>>, vector<16x768xf32>,
    %c3 = arith.constant 3 : index
    %c0_20 = arith.constant 0 : index
    %51 = vector.load %arg6[%c3, %c0_20] : memref<9x768xf32, #tpu.memory_space<vmem>>, vector<1x768xf32>
    %52 = vector.shape_cast %51 : vector<1x768xf32> to vector<768xf32>
    %53 = vector.shape_cast %52 : vector<768xf32> to vector<1x768xf32>
    %54 = vector.broadcast %53 : vector<1x768xf32> to vector<16x768xf32>
    %55 = arith.mulf %30, %54 : vector<16x768xf32>
    %c4 = arith.constant 4 : index
    %c0_21 = arith.constant 0 : index
    %56 = vector.load %arg6[%c4, %c0_21] : memref<9x768xf32, #tpu.memory_space<vmem>>, vector<1x768xf32>
    %57 = vector.shape_cast %56 : vector<1x768xf32> to vector<768xf32>
    %58 = vector.shape_cast %57 : vector<768xf32> to vector<1x768xf32>
    %59 = vector.broadcast %58 : vector<1x768xf32> to vector<16x768xf32>
    %60 = arith.mulf %27, %59 : vector<16x768xf32>
    %61 = arith.addf %55, %60 : vector<16x768xf32>
    %c5 = arith.constant 5 : index
    %c0_22 = arith.constant 0 : index
    %62 = vector.load %arg6[%c5, %c0_22] : memref<9x768xf32, #tpu.memory_space<vmem>>, vector<1x768xf32>
    %63 = vector.shape_cast %62 : vector<1x768xf32> to vector<768xf32>
    %64 = vector.shape_cast %63 : vector<768xf32> to vector<1x768xf32>
    %65 = vector.broadcast %64 : vector<1x768xf32> to vector<16x768xf32>
    %66 = arith.mulf %32, %65 : vector<16x768xf32>
    %67 = arith.addf %61, %66 : vector<16x768xf32>
    %c16 = arith.constant 16 : index
    %c0_23 = arith.constant 0 : index
    %68 = vector.load %arg11[%c16, %c0_23] : memref<48x768xf32, #tpu.memory_space<vmem>>, vector<16x768xf32>
    tpu.vector_store %arg11[%c16, %c0_23], %67 {strides = array<i32>} : memref<48x768xf32, #tpu.memory_space<vmem>>, vector<16x768xf32>,
    %c6 = arith.constant 6 : index
    %c0_24 = arith.constant 0 : index
    %69 = vector.load %arg6[%c6, %c0_24] : memref<9x768xf32, #tpu.memory_space<vmem>>, vector<1x768xf32>
    %70 = vector.shape_cast %69 : vector<1x768xf32> to vector<768xf32>
    %71 = vector.shape_cast %70 : vector<768xf32> to vector<1x768xf32>
    %72 = vector.broadcast %71 : vector<1x768xf32> to vector<16x768xf32>
    %73 = arith.mulf %30, %72 : vector<16x768xf32>
    %c7 = arith.constant 7 : index
    %c0_25 = arith.constant 0 : index
    %74 = vector.load %arg6[%c7, %c0_25] : memref<9x768xf32, #tpu.memory_space<vmem>>, vector<1x768xf32>
    %75 = vector.shape_cast %74 : vector<1x768xf32> to vector<768xf32>
    %76 = vector.shape_cast %75 : vector<768xf32> to vector<1x768xf32>
    %77 = vector.broadcast %76 : vector<1x768xf32> to vector<16x768xf32>
    %78 = arith.mulf %27, %77 : vector<16x768xf32>
    %79 = arith.addf %73, %78 : vector<16x768xf32>
    %c8 = arith.constant 8 : index
    %c0_26 = arith.constant 0 : index
    %80 = vector.load %arg6[%c8, %c0_26] : memref<9x768xf32, #tpu.memory_space<vmem>>, vector<1x768xf32>
    %81 = vector.shape_cast %80 : vector<1x768xf32> to vector<768xf32>
    %82 = vector.shape_cast %81 : vector<768xf32> to vector<1x768xf32>
    %83 = vector.broadcast %82 : vector<1x768xf32> to vector<16x768xf32>
    %84 = arith.mulf %32, %83 : vector<16x768xf32>
    %85 = arith.addf %79, %84 : vector<16x768xf32>
    %c32 = arith.constant 32 : index
    %c0_27 = arith.constant 0 : index
    %86 = vector.load %arg11[%c32, %c0_27] : memref<48x768xf32, #tpu.memory_space<vmem>>, vector<16x768xf32>
    tpu.vector_store %arg11[%c32, %c0_27], %85 {strides = array<i32>} : memref<48x768xf32, #tpu.memory_space<vmem>>, vector<16x768xf32>,
    %c0_28 = arith.constant 0 : index
    %c0_29 = arith.constant 0 : index
    %87 = vector.load %arg7[%c0_28, %c0_29] : memref<16x48xf32, #tpu.memory_space<vmem>>, vector<16x48xf32>
    %c0_30 = arith.constant 0 : index
    %c0_31 = arith.constant 0 : index
    %88 = vector.load %arg11[%c0_30, %c0_31] : memref<48x768xf32, #tpu.memory_space<vmem>>, vector<48x768xf32>
    %cst_32 = arith.constant dense<0.000000e+00> : vector<16x768xf32>
    %89 = tpu.matmul %87, %88, %cst_32 {dimension_numbers = #tpu.dot_dimension_numbers<[1], [0], [0], [1], [0, 0, 1, 1], [], []>} : vector<16x48xf32>, vector<48x768xf32>, vector<16x768xf32> -> vector<16x768xf32>
    %c0_33 = arith.constant 0 : index
    %c0_34 = arith.constant 0 : index
    %90 = vector.load %arg8[%c0_33, %c0_34] : memref<1x768xf32, #tpu.memory_space<vmem>>, vector<1x768xf32>
    %91 = vector.shape_cast %90 : vector<1x768xf32> to vector<768xf32>
    %92 = vector.shape_cast %91 : vector<768xf32> to vector<1x768xf32>
    %93 = vector.broadcast %92 : vector<1x768xf32> to vector<16x768xf32>
    %94 = arith.addf %89, %93 : vector<16x768xf32>
    %cst_35 = arith.constant 0.000000e+00 : f32
    %95 = vector.broadcast %cst_35 : f32 to vector<16x768xf32>
    %96 = arith.cmpf oge, %94, %95 : vector<16x768xf32>
    %cst_36 = arith.constant 0.00999999977 : f32
    %97 = vector.broadcast %cst_36 : f32 to vector<16x768xf32>
    %98 = arith.mulf %97, %94 : vector<16x768xf32>
    %99 = arith.select %96, %94, %98 : vector<16x768xi1>, vector<16x768xf32>
    %c0_37 = arith.constant 0 : index
    %c0_38 = arith.constant 0 : index
    %100 = vector.load %arg9[%c0_37, %c0_38] : memref<768x128xf32, #tpu.memory_space<vmem>>, vector<768x128xf32>
    %cst_39 = arith.constant dense<0.000000e+00> : vector<16x128xf32>
    %101 = tpu.matmul %99, %100, %cst_39 {dimension_numbers = #tpu.dot_dimension_numbers<[1], [0], [0], [1], [0, 0, 1, 1], [], []>} : vector<16x768xf32>, vector<768x128xf32>, vector<16x128xf32> -> vector<16x128xf32>
    %102 = arith.addf %101, %0 : vector<16x128xf32>
    %c0_40 = arith.constant 0 : index
    %c0_41 = arith.constant 0 : index
    %103 = vector.load %arg10[%c0_40, %c0_41] : memref<16x128xf32, #tpu.memory_space<vmem>>, vector<16x128xf32>
    tpu.vector_store %arg10[%c0_40, %c0_41], %102 {strides = array<i32>} : memref<16x128xf32, #tpu.memory_space<vmem>>, vector<16x128xf32>,
    return
  }
  func.func @transform_0(%arg0: i32) -> (i32, i32) {
    %c0_i32 = arith.constant 0 : i32
    %c0_i32_0 = arith.constant 0 : i32
    return %arg0, %c0_i32 : i32, i32
  }
  func.func @transform_1(%arg0: i32) -> (i32, i32) {
    %c0_i32 = arith.constant 0 : i32
    %c0_i32_0 = arith.constant 0 : i32
    %c0_i32_1 = arith.constant 0 : i32
    return %c0_i32, %c0_i32_0 : i32, i32
  }
  func.func @transform_2(%arg0: i32) -> (i32, i32) {
    %c0_i32 = arith.constant 0 : i32
    %c0_i32_0 = arith.constant 0 : i32
    %c0_i32_1 = arith.constant 0 : i32
    return %c0_i32, %c0_i32_0 : i32, i32
  }
  func.func @transform_3(%arg0: i32) -> (i32, i32) {
    %c0_i32 = arith.constant 0 : i32
    %c0_i32_0 = arith.constant 0 : i32
    %c0_i32_1 = arith.constant 0 : i32
    return %c0_i32, %c0_i32_0 : i32, i32
  }
  func.func @transform_4(%arg0: i32) -> (i32, i32) {
    %c0_i32 = arith.constant 0 : i32
    %c0_i32_0 = arith.constant 0 : i32
    %c0_i32_1 = arith.constant 0 : i32
    return %c0_i32, %c0_i32_0 : i32, i32
  }
  func.func @transform_5(%arg0: i32) -> (i32, i32) {
    %c0_i32 = arith.constant 0 : i32
    %c0_i32_0 = arith.constant 0 : i32
    %c0_i32_1 = arith.constant 0 : i32
    return %c0_i32, %c0_i32_0 : i32, i32
  }
  func.func @transform_6(%arg0: i32) -> (i32, i32) {
    %c0_i32 = arith.constant 0 : i32
    %c0_i32_0 = arith.constant 0 : i32
    %c0_i32_1 = arith.constant 0 : i32
    return %c0_i32, %c0_i32_0 : i32, i32
  }
  func.func @transform_7(%arg0: i32) -> (i32, i32) {
    %c0_i32 = arith.constant 0 : i32
    %c0_i32_0 = arith.constant 0 : i32
    %c0_i32_1 = arith.constant 0 : i32
    return %c0_i32, %c0_i32_0 : i32, i32
  }
  func.func @transform_8(%arg0: i32) -> (i32, i32) {
    %c0_i32 = arith.constant 0 : i32
    %c0_i32_0 = arith.constant 0 : i32
    %c0_i32_1 = arith.constant 0 : i32
    return %c0_i32, %c0_i32_0 : i32, i32
  }
  func.func @transform_9(%arg0: i32) -> (i32, i32) {
    %c0_i32 = arith.constant 0 : i32
    %c0_i32_0 = arith.constant 0 : i32
    return %arg0, %c0_i32 : i32, i32
  }
}

</mosaic_0001>

<llo_original>
// kernel: tpu_custom_call.1
$region0: #{tpu_custom_call.1}
  #allocation0 [shape = 'u32[]', space=smem, size = 0x4, offset = 0x4, fixed_abs, tag = 'smem constant byte address 0x4 - core index']
  #allocation1 [shape = 'u32[144,128]{1,0:T(1,128)}', space=vmem, size = 0x12000, scoped, tag = 'internal scratch']
  #allocation2 [shape = 'f32[48,768]{1,0:T(8,128)}', space=vmem, size = 0x24000, scoped, tag = 'scratch operand']
  %s0 = inlined_call_operand.hbm [shape: f32[32,128], index: 0, kind: input, shape index: {}]
  %s1 = inlined_call_operand.hbm [shape: f32[1,128], index: 1, kind: input, shape index: {}]
  %s2 = inlined_call_operand.hbm [shape: f32[1,128], index: 2, kind: input, shape index: {}]
  %s3 = inlined_call_operand.hbm [shape: f32[128,768], index: 3, kind: input, shape index: {}]
  %s4 = inlined_call_operand.vmem [shape: f32[1,768], index: 4, kind: input, shape index: {}]
  %s5 = inlined_call_operand.hbm [shape: f32[9,768], index: 5, kind: input, shape index: {}]
  %s6 = inlined_call_operand.hbm [shape: f32[16,48], index: 6, kind: input, shape index: {}]
  %s7 = inlined_call_operand.vmem [shape: f32[1,768], index: 7, kind: input, shape index: {}]
  %s8 = inlined_call_operand.hbm [shape: f32[768,128], index: 8, kind: input, shape index: {}]
  %s9 = inlined_call_operand.hbm [shape: f32[32,128], index: 9, kind: output, shape index: {}]
  %s10 = sld [smem:[#allocation0]]
  $region97: #{tpu_custom_call.1} parent=0
    _
  %s12 = ssub.s32 1, %s10
  %s13 = scalar_select 0, %s12, %s10
  $region1: #{tpu_custom_call.1} parent=0
    #allocation3 [shape = 'u8[16384]{0}', space=vmem, size = 0x4000, scoped, tag = 'input window, operand 0']
    #allocation4 [shape = 's32[2]{0}', space=sflag, size = 0x8, scoped, tag = 'scoped memory for tpu_custom_call.1']
    #allocation5 [shape = 's32[2]{0}', space=sflag, size = 0x8, scoped, tag = 'scoped memory for tpu_custom_call.1']
    #allocation6 [shape = 'u8[512]{0}', space=vmem, size = 0x400, scoped, tag = 'input window, operand 1, single buffered']
    #allocation7 [shape = 's32[1]{0}', space=sflag, size = 0x4, scoped, tag = 'scoped memory for tpu_custom_call.1']
    #allocation8 [shape = 'u8[512]{0}', space=vmem, size = 0x400, scoped, tag = 'input window, operand 2, single buffered']
    #allocation9 [shape = 'u8[393216]{0}', space=vmem, size = 0x60000, scoped, tag = 'input window, operand 3, single buffered']
    #allocation10 [shape = 's32[1]{0}', space=sflag, size = 0x4, scoped, tag = 'scoped memory for tpu_custom_call.1']
    #allocation11 [shape = 'u8[49152]{0}', space=vmem, size = 0xc000, scoped, tag = 'input window, operand 5, single buffered']
    #allocation12 [shape = 'u8[8192]{0}', space=vmem, size = 0x2000, scoped, tag = 'input window, operand 6, single buffered']
    #allocation13 [shape = 's32[1]{0}', space=sflag, size = 0x4, scoped, tag = 'scoped memory for tpu_custom_call.1']
    #allocation14 [shape = 'u8[393216]{0}', space=vmem, size = 0x60000, scoped, tag = 'input window, operand 8, single buffered']
    #allocation15 [shape = 'u8[16384]{0}', space=vmem, size = 0x4000, scoped, tag = 'output window, operand 0']
    %14 = vsyncpa [#allocation4], 0
    %s15 = scalar_lea.sflag [#allocation4], 1
    %16 = vsyncpa %s15, 0
    %17 = vsyncpa [#allocation7], 0
    %18 = vsyncpa [#allocation10], 0
    %19 = vsyncpa [#allocation13], 0
    %20 = vsyncpa [#allocation5], 0
    %s21 = scalar_lea.sflag [#allocation5], 1
    %22 = vsyncpa %s21, 0
    loop: start=0, step=1, limit=4
    $region2: #{tpu_custom_call.1} parent=1 // loop_pre_header
      _
    $region3: #{tpu_custom_call.1} parent=1 // loop_header
      %s24 = sphi 0, %s28
      %p25 = scmp.ge.s32.totalorder %s24, 4
      %s34 = sphi 0, %s36
      %s37 = sphi 0, %s34
      %s38 = sphi 0, %s37
      %s54 = sphi 0, %s38
      %s58 = sphi 0, %s58
      %s60 = sphi 0, %s58
      %s61 = sphi 0, %s60
      %s75 = sphi 0, %s61
      %s79 = sphi 0, %s79
      %s81 = sphi 0, %s79
      %s82 = sphi 0, %s81
      %s96 = sphi 0, %s82
      %s100 = sphi 0, %s100
      %s102 = sphi 0, %s100
      %s103 = sphi 0, %s102
      %s117 = sphi 0, %s103
      %s121 = sphi 0, %s121
      %s123 = sphi 0, %s121
      %s124 = sphi 0, %s123
      %s138 = sphi 0, %s124
      %s142 = sphi 0, %s142
      %s144 = sphi 0, %s142
      %s145 = sphi 0, %s144
      %s159 = sphi 0, %s145
      %s163 = sphi 0, %s163
      %s165 = sphi 0, %s163
      %s166 = sphi 0, %s165
      %s180 = sphi 0, %s166
      %s184 = sphi 0, %s184
      %s186 = sphi 0, %s184
      %s187 = sphi 0, %s186
      %s201 = sphi 0, %s187
      %s205 = sphi 0, %s205
      %s207 = sphi 0, %s205
      %s208 = sphi 0, %s207
      %s222 = sphi 0, %s208
      %s228 = sphi 0, %s230
      %s231 = sphi 0, %s228
      %s232 = sphi 0, %s231
      %s248 = sphi 0, %s232
    $region4: #{tpu_custom_call.1} parent=1 // loop_header_branch
      %27 = sbr.rel (%p25) target = $region8
    $region5: #{tpu_custom_call.1} parent=1 // loop_body
      %s29 = ssub.s32 %s24, 1
      %s30 = ssub.s32 %s24, 2
      %s31 = sadd.s32 %s24, 1
      %s32 = ssub.s32 %s24, %s31
      %p33 = scmp.eq.s32.totalorder %s32, 0
      %s35 = sadd.s32 %s34, 1
      %s36 = scalar_select %p33, %s34, %s35
      %p39 = pneg %p33
      %p40 = scmp.eq.s32.totalorder %s24, 1
      %p41 = por %p39, %p40
      %p42 = scmp.ne.s32.totalorder %s34, %s37
      %p43 = scmp.eq.s32.totalorder %s24, 0
      %p44 = por %p42, %p43
      %p45 = scmp.ne.s32.totalorder %s34, %s37
      %p46 = scmp.eq.s32.totalorder %s29, 1
      %p47 = por %p45, %p46
      %p48 = scmp.ne.s32.totalorder %s37, %s38
      %p49 = scmp.eq.s32.totalorder %s29, 0
      %p50 = por %p48, %p49
      %p51 = scmp.ne.s32.totalorder %s37, %s38
      %p52 = scmp.eq.s32.totalorder %s30, 1
      %p53 = por %p51, %p52
      %p55 = scmp.ne.s32.totalorder %s38, %s54
      %p56 = scmp.eq.s32.totalorder %s30, 0
      %p57 = por %p55, %p56
      %s59 = sadd.s32 %s58, 1
      %p62 = scmp.eq.s32.totalorder %s24, 1
      %p63 = scmp.ne.s32.totalorder %s58, %s60
      %p64 = scmp.eq.s32.totalorder %s24, 0
      %p65 = por %p63, %p64
      %p66 = scmp.ne.s32.totalorder %s58, %s60
      %p67 = scmp.eq.s32.totalorder %s29, 1
      %p68 = por %p66, %p67
      %p69 = scmp.ne.s32.totalorder %s60, %s61
      %p70 = scmp.eq.s32.totalorder %s29, 0
      %p71 = por %p69, %p70
      %p72 = scmp.ne.s32.totalorder %s60, %s61
      %p73 = scmp.eq.s32.totalorder %s30, 1
      %p74 = por %p72, %p73
      %p76 = scmp.ne.s32.totalorder %s61, %s75
      %p77 = scmp.eq.s32.totalorder %s30, 0
      %p78 = por %p76, %p77
      %s80 = sadd.s32 %s79, 1
      %p83 = scmp.eq.s32.totalorder %s24, 1
      %p84 = scmp.ne.s32.totalorder %s79, %s81
      %p85 = scmp.eq.s32.totalorder %s24, 0
      %p86 = por %p84, %p85
      %p87 = scmp.ne.s32.totalorder %s79, %s81
      %p88 = scmp.eq.s32.totalorder %s29, 1
      %p89 = por %p87, %p88
      %p90 = scmp.ne.s32.totalorder %s81, %s82
      %p91 = scmp.eq.s32.totalorder %s29, 0
      %p92 = por %p90, %p91
      %p93 = scmp.ne.s32.totalorder %s81, %s82
      %p94 = scmp.eq.s32.totalorder %s30, 1
      %p95 = por %p93, %p94
      %p97 = scmp.ne.s32.totalorder %s82, %s96
      %p98 = scmp.eq.s32.totalorder %s30, 0
      %p99 = por %p97, %p98
      %s101 = sadd.s32 %s100, 1
      %p104 = scmp.eq.s32.totalorder %s24, 1
      %p105 = scmp.ne.s32.totalorder %s100, %s102
      %p106 = scmp.eq.s32.totalorder %s24, 0
      %p107 = por %p105, %p106
      %p108 = scmp.ne.s32.totalorder %s100, %s102
      %p109 = scmp.eq.s32.totalorder %s29, 1
      %p110 = por %p108, %p109
      %p111 = scmp.ne.s32.totalorder %s102, %s103
      %p112 = scmp.eq.s32.totalorder %s29, 0
      %p113 = por %p111, %p112
      %p114 = scmp.ne.s32.totalorder %s102, %s103
      %p115 = scmp.eq.s32.totalorder %s30, 1
      %p116 = por %p114, %p115
      %p118 = scmp.ne.s32.totalorder %s103, %s117
      %p119 = scmp.eq.s32.totalorder %s30, 0
      %p120 = por %p118, %p119
      %s122 = sadd.s32 %s121, 1
      %p125 = scmp.eq.s32.totalorder %s24, 1
      %p126 = scmp.ne.s32.totalorder %s121, %s123
      %p127 = scmp.eq.s32.totalorder %s24, 0
      %p128 = por %p126, %p127
      %p129 = scmp.ne.s32.totalorder %s121, %s123
      %p130 = scmp.eq.s32.totalorder %s29, 1
      %p131 = por %p129, %p130
      %p132 = scmp.ne.s32.totalorder %s123, %s124
      %p133 = scmp.eq.s32.totalorder %s29, 0
      %p134 = por %p132, %p133
      %p135 = scmp.ne.s32.totalorder %s123, %s124
      %p136 = scmp.eq.s32.totalorder %s30, 1
      %p137 = por %p135, %p136
      %p139 = scmp.ne.s32.totalorder %s124, %s138
      %p140 = scmp.eq.s32.totalorder %s30, 0
      %p141 = por %p139, %p140
      %s143 = sadd.s32 %s142, 1
      %p146 = scmp.eq.s32.totalorder %s24, 1
      %p147 = scmp.ne.s32.totalorder %s142, %s144
      %p148 = scmp.eq.s32.totalorder %s24, 0
      %p149 = por %p147, %p148
      %p150 = scmp.ne.s32.totalorder %s142, %s144
      %p151 = scmp.eq.s32.totalorder %s29, 1
      %p152 = por %p150, %p151
      %p153 = scmp.ne.s32.totalorder %s144, %s145
      %p154 = scmp.eq.s32.totalorder %s29, 0
      %p155 = por %p153, %p154
      %p156 = scmp.ne.s32.totalorder %s144, %s145
      %p157 = scmp.eq.s32.totalorder %s30, 1
      %p158 = por %p156, %p157
      %p160 = scmp.ne.s32.totalorder %s145, %s159
      %p161 = scmp.eq.s32.totalorder %s30, 0
      %p162 = por %p160, %p161
      %s164 = sadd.s32 %s163, 1
      %p167 = scmp.eq.s32.totalorder %s24, 1
      %p168 = scmp.ne.s32.totalorder %s163, %s165
      %p169 = scmp.eq.s32.totalorder %s24, 0
      %p170 = por %p168, %p169
      %p171 = scmp.ne.s32.totalorder %s163, %s165
      %p172 = scmp.eq.s32.totalorder %s29, 1
      %p173 = por %p171, %p172
      %p174 = scmp.ne.s32.totalorder %s165, %s166
      %p175 = scmp.eq.s32.totalorder %s29, 0
      %p176 = por %p174, %p175
      %p177 = scmp.ne.s32.totalorder %s165, %s166
      %p178 = scmp.eq.s32.totalorder %s30, 1
      %p179 = por %p177, %p178
      %p181 = scmp.ne.s32.totalorder %s166, %s180
      %p182 = scmp.eq.s32.totalorder %s30, 0
      %p183 = por %p181, %p182
      %s185 = sadd.s32 %s184, 1
      %p188 = scmp.eq.s32.totalorder %s24, 1
      %p189 = scmp.ne.s32.totalorder %s184, %s186
      %p190 = scmp.eq.s32.totalorder %s24, 0
      %p191 = por %p189, %p190
      %p192 = scmp.ne.s32.totalorder %s184, %s186
      %p193 = scmp.eq.s32.totalorder %s29, 1
      %p194 = por %p192, %p193
      %p195 = scmp.ne.s32.totalorder %s186, %s187
      %p196 = scmp.eq.s32.totalorder %s29, 0
      %p197 = por %p195, %p196
      %p198 = scmp.ne.s32.totalorder %s186, %s187
      %p199 = scmp.eq.s32.totalorder %s30, 1
      %p200 = por %p198, %p199
      %p202 = scmp.ne.s32.totalorder %s187, %s201
      %p203 = scmp.eq.s32.totalorder %s30, 0
      %p204 = por %p202, %p203
      %s206 = sadd.s32 %s205, 1
      %p209 = scmp.eq.s32.totalorder %s24, 1
      %p210 = scmp.ne.s32.totalorder %s205, %s207
      %p211 = scmp.eq.s32.totalorder %s24, 0
      %p212 = por %p210, %p211
      %p213 = scmp.ne.s32.totalorder %s205, %s207
      %p214 = scmp.eq.s32.totalorder %s29, 1
      %p215 = por %p213, %p214
      %p216 = scmp.ne.s32.totalorder %s207, %s208
      %p217 = scmp.eq.s32.totalorder %s29, 0
      %p218 = por %p216, %p217
      %p219 = scmp.ne.s32.totalorder %s207, %s208
      %p220 = scmp.eq.s32.totalorder %s30, 1
      %p221 = por %p219, %p220
      %p223 = scmp.ne.s32.totalorder %s208, %s222
      %p224 = scmp.eq.s32.totalorder %s30, 0
      %p225 = por %p223, %p224
      %s226 = ssub.s32 %s24, %s31
      %p227 = scmp.eq.s32.totalorder %s226, 0
      %s229 = sadd.s32 %s228, 1
      %s230 = scalar_select %p227, %s228, %s229
      %p233 = pneg %p227
      %p234 = scmp.eq.s32.totalorder %s24, 1
      %p235 = por %p233, %p234
      %p236 = scmp.ne.s32.totalorder %s228, %s231
      %p237 = scmp.eq.s32.totalorder %s24, 0
      %p238 = por %p236, %p237
      %p239 = scmp.ne.s32.totalorder %s228, %s231
      %p240 = scmp.eq.s32.totalorder %s29, 1
      %p241 = por %p239, %p240
      %p242 = scmp.ne.s32.totalorder %s231, %s232
      %p243 = scmp.eq.s32.totalorder %s29, 0
      %p244 = por %p242, %p243
      %p245 = scmp.ne.s32.totalorder %s231, %s232
      %p246 = scmp.eq.s32.totalorder %s30, 1
      %p247 = por %p245, %p246
      %p249 = scmp.ne.s32.totalorder %s232, %s248
      %p250 = scmp.eq.s32.totalorder %s30, 0
      %p251 = por %p249, %p250
      %p252 = scmp.le.s32.totalorder 1, %s24
      %p253 = scmp.lt.s32.totalorder %s24, 3
      %p254 = pnand %p252, %p253
      %p255 = pneg %p254
      // Predicated region
      $region9: #{tpu_custom_call.1} parent=5 // pred_check
        _
      $region10: #{tpu_custom_call.1} parent=5 // pred_check_branch
        %257 = sbr.rel (%p254) target = $region12
      $region11: #{tpu_custom_call.1} parent=5 // pred_region
        %s258 = ssub.s32 %s24, 1
        // Predicated region
        $region13: #{tpu_custom_call.1} parent=11 // pred_check
          %p259 = pneg %p71
        $region14: #{tpu_custom_call.1} parent=11 // pred_check_branch
          %261 = sbr.rel (%p259) target = $region16
        $region15: #{tpu_custom_call.1} parent=11 // pred_region
          %s263 = ssub.s32 16, 16
          %264 = vsyncadd [#allocation7], %s263
          %s266 = sshll.u32 [#allocation6], 4
          %s267 = int_to_ptr.vmem [resolvable:$true] %s266
          %269 = dma.hbm_to_vmem [thread:$0]  %s1, 16, %s267, [#allocation7]
        $region16: #{tpu_custom_call.1} parent=11 // pred_fallthru
          _
        // Predicated region
        $region17: #{tpu_custom_call.1} parent=11 // pred_check
          %p270 = pneg %p92
        $region18: #{tpu_custom_call.1} parent=11 // pred_check_branch
          %272 = sbr.rel (%p270) target = $region20
        $region19: #{tpu_custom_call.1} parent=11 // pred_region
          %s274 = ssub.s32 16, 16
          %275 = vsyncadd [#allocation7], %s274
          %s277 = sshll.u32 [#allocation8], 4
          %s278 = int_to_ptr.vmem [resolvable:$true] %s277
          %280 = dma.hbm_to_vmem [thread:$0]  %s2, 16, %s278, [#allocation7]
        $region20: #{tpu_custom_call.1} parent=11 // pred_fallthru
          _
        // Predicated region
        $region21: #{tpu_custom_call.1} parent=11 // pred_check
          %p281 = pneg %p113
        $region22: #{tpu_custom_call.1} parent=11 // pred_check_branch
          %283 = sbr.rel (%p281) target = $region24
        $region23: #{tpu_custom_call.1} parent=11 // pred_region
          %s285 = ssub.s32 12288, 12288
          %286 = vsyncadd [#allocation10], %s285
          %s287 = sshll.u32 [#allocation9], 4
          %s288 = int_to_ptr.vmem [resolvable:$true] %s287
          %293 = dma.hbm_to_vmem [thread:$0]  %s3, 12288, %s288, [#allocation10], 768, 768, 48
        $region24: #{tpu_custom_call.1} parent=11 // pred_fallthru
          _
        // Predicated region
        $region25: #{tpu_custom_call.1} parent=11 // pred_check
          %p294 = pneg %p134
        $region26: #{tpu_custom_call.1} parent=11 // pred_check_branch
          %296 = sbr.rel (%p294) target = $region28
        $region27: #{tpu_custom_call.1} parent=11 // pred_region
          _
        $region28: #{tpu_custom_call.1} parent=11 // pred_fallthru
          _
        // Predicated region
        $region29: #{tpu_custom_call.1} parent=11 // pred_check
          %p297 = pneg %p155
        $region30: #{tpu_custom_call.1} parent=11 // pred_check_branch
          %299 = sbr.rel (%p297) target = $region32
        $region31: #{tpu_custom_call.1} parent=11 // pred_region
          %s301 = ssub.s32 1536, 1536
          %302 = vsyncadd [#allocation10], %s301
          %s303 = sshll.u32 [#allocation11], 4
          %s304 = int_to_ptr.vmem [resolvable:$true] %s303
          %309 = dma.hbm_to_vmem [thread:$0]  %s5, 1536, %s304, [#allocation10], 768, 768, 48
        $region32: #{tpu_custom_call.1} parent=11 // pred_fallthru
          _
        // Predicated region
        $region33: #{tpu_custom_call.1} parent=11 // pred_check
          %p310 = pneg %p176
        $region34: #{tpu_custom_call.1} parent=11 // pred_check_branch
          %312 = sbr.rel (%p310) target = $region36
        $region35: #{tpu_custom_call.1} parent=11 // pred_region
          %s314 = ssub.s32 256, 256
          %315 = vsyncadd [#allocation13], %s314
          %s316 = sshll.u32 [#allocation12], 4
          %s317 = int_to_ptr.vmem [resolvable:$true] %s316
          %322 = dma.hbm_to_vmem [thread:$0]  %s6, 256, %s317, [#allocation13], 128, 128, 8
        $region36: #{tpu_custom_call.1} parent=11 // pred_fallthru
          _
        // Predicated region
        $region37: #{tpu_custom_call.1} parent=11 // pred_check
          %p323 = pneg %p197
        $region38: #{tpu_custom_call.1} parent=11 // pred_check_branch
          %325 = sbr.rel (%p323) target = $region40
        $region39: #{tpu_custom_call.1} parent=11 // pred_region
          _
        $region40: #{tpu_custom_call.1} parent=11 // pred_fallthru
          _
        // Predicated region
        $region41: #{tpu_custom_call.1} parent=11 // pred_check
          %p326 = pneg %p218
        $region42: #{tpu_custom_call.1} parent=11 // pred_check_branch
          %328 = sbr.rel (%p326) target = $region44
        $region43: #{tpu_custom_call.1} parent=11 // pred_region
          %s330 = ssub.s32 12288, 12288
          %331 = vsyncadd [#allocation13], %s330
          %s332 = sshll.u32 [#allocation14], 4
          %s333 = int_to_ptr.vmem [resolvable:$true] %s332
          %338 = dma.hbm_to_vmem [thread:$0]  %s8, 12288, %s333, [#allocation13], 128, 128, 8
        $region44: #{tpu_custom_call.1} parent=11 // pred_fallthru
          _
      $region12: #{tpu_custom_call.1} parent=5 // pred_fallthru
        _
      %p339 = scmp.lt.s32.totalorder %s24, 2
      // Predicated region
      $region45: #{tpu_custom_call.1} parent=5 // pred_check
        %p340 = pneg %p339
      $region46: #{tpu_custom_call.1} parent=5 // pred_check_branch
        %342 = sbr.rel (%p340) target = $region48
      $region47: #{tpu_custom_call.1} parent=5 // pred_region
        // Predicated region
        $region49: #{tpu_custom_call.1} parent=47 // pred_check
          %p343 = pneg %p44
        $region50: #{tpu_custom_call.1} parent=47 // pred_check_branch
          %345 = sbr.rel (%p343) target = $region52
        $region51: #{tpu_custom_call.1} parent=47 // pred_region
          %s346 = sand.u32 %s34, 1
          %s347 = scalar_lea.sflag [#allocation4], %s346
          %s348 = sand.u32 %s34, 1
          %s349 = smul.addr %s348, 16
          %s350 = scalar_lea.vmem [#allocation3], %s349
          %s351 = smul.u32 2, %s24
          %s353 = ssub.s32 256, 256
          %354 = vsyncadd %s347, %s353
          %s355 = smul.addr %s351, 128
          %s356 = scalar_lea.hbm %s0, %s355
          %s357 = sshll.u32 %s350, 4
          %s358 = int_to_ptr.vmem [resolvable:$true] %s357
          %363 = dma.hbm_to_vmem [thread:$0]  %s356, 256, %s358, %s347, 128, 128, 8
        $region52: #{tpu_custom_call.1} parent=47 // pred_fallthru
          _
      $region48: #{tpu_custom_call.1} parent=5 // pred_fallthru
        _
      %p364 = scmp.le.s32.totalorder 1, %s24
      %p365 = scmp.lt.s32.totalorder %s24, 3
      %p366 = pnand %p364, %p365
      %p367 = pneg %p366
      // Predicated region
      $region53: #{tpu_custom_call.1} parent=5 // pred_check
        _
      $region54: #{tpu_custom_call.1} parent=5 // pred_check_branch
        %369 = sbr.rel (%p366) target = $region56
      $region55: #{tpu_custom_call.1} parent=5 // pred_region
        %s370 = ssub.s32 %s24, 1
        %s371 = sand.u32 %s37, 1
        %s372 = scalar_lea.sflag [#allocation4], %s371
        %s373 = sand.u32 %s37, 1
        %s374 = smul.addr %s373, 16
        %s375 = scalar_lea.vmem [#allocation3], %s374
        // Predicated region
        $region57: #{tpu_custom_call.1} parent=55 // pred_check
          %p376 = pneg %p50
        $region58: #{tpu_custom_call.1} parent=55 // pred_check_branch
          %378 = sbr.rel (%p376) target = $region60
        $region59: #{tpu_custom_call.1} parent=55 // pred_region
          %379 = dma.done %s372, 256
        $region60: #{tpu_custom_call.1} parent=55 // pred_fallthru
          _
        // Predicated region
        $region61: #{tpu_custom_call.1} parent=55 // pred_check
          %p380 = pneg %p71
        $region62: #{tpu_custom_call.1} parent=55 // pred_check_branch
          %382 = sbr.rel (%p380) target = $region64
        $region63: #{tpu_custom_call.1} parent=55 // pred_region
          %383 = dma.done [#allocation7], 16
        $region64: #{tpu_custom_call.1} parent=55 // pred_fallthru
          _
        // Predicated region
        $region65: #{tpu_custom_call.1} parent=55 // pred_check
          %p384 = pneg %p92
        $region66: #{tpu_custom_call.1} parent=55 // pred_check_branch
          %386 = sbr.rel (%p384) target = $region68
        $region67: #{tpu_custom_call.1} parent=55 // pred_region
          %387 = dma.done [#allocation7], 16
        $region68: #{tpu_custom_call.1} parent=55 // pred_fallthru
          _
        // Predicated region
        $region69: #{tpu_custom_call.1} parent=55 // pred_check
          %p388 = pneg %p113
        $region70: #{tpu_custom_call.1} parent=55 // pred_check_branch
          %390 = sbr.rel (%p388) target = $region72
        $region71: #{tpu_custom_call.1} parent=55 // pred_region
          %391 = dma.done [#allocation10], 12288
        $region72: #{tpu_custom_call.1} parent=55 // pred_fallthru
          _
        // Predicated region
        $region73: #{tpu_custom_call.1} parent=55 // pred_check
          %p392 = pneg %p155
        $region74: #{tpu_custom_call.1} parent=55 // pred_check_branch
          %394 = sbr.rel (%p392) target = $region76
        $region75: #{tpu_custom_call.1} parent=55 // pred_region
          %395 = dma.done [#allocation10], 1536
        $region76: #{tpu_custom_call.1} parent=55 // pred_fallthru
          _
        // Predicated region
        $region77: #{tpu_custom_call.1} parent=55 // pred_check
          %p396 = pneg %p176
        $region78: #{tpu_custom_call.1} parent=55 // pred_check_branch
          %398 = sbr.rel (%p396) target = $region80
        $region79: #{tpu_custom_call.1} parent=55 // pred_region
          %399 = dma.done [#allocation13], 256
        $region80: #{tpu_custom_call.1} parent=55 // pred_fallthru
          _
        // Predicated region
        $region81: #{tpu_custom_call.1} parent=55 // pred_check
          %p400 = pneg %p218
        $region82: #{tpu_custom_call.1} parent=55 // pred_check_branch
          %402 = sbr.rel (%p400) target = $region84
        $region83: #{tpu_custom_call.1} parent=55 // pred_region
          %403 = dma.done [#allocation13], 12288
        $region84: #{tpu_custom_call.1} parent=55 // pred_fallthru
          _
        %s404 = sand.u32 %s37, 1
        %s405 = scalar_lea.sflag [#allocation4], %s404
        %s406 = sand.u32 %s37, 1
        %s407 = smul.addr %s406, 16
        %s408 = scalar_lea.vmem [#allocation3], %s407
        %p409 = pneg %p50
        %p410 = pneg %p47
        %p411 = pneg %p71
        %p412 = pneg %p68
        %p413 = pneg %p92
        %p414 = pneg %p89
        %p415 = pneg %p113
        %p416 = pneg %p110
        %p417 = pneg %p134
        %p418 = pneg %p131
        %p419 = pneg %p155
        %p420 = pneg %p152
        %p421 = pneg %p176
        %p422 = pneg %p173
        %p423 = pneg %p197
        %p424 = pneg %p194
        %p425 = pneg %p218
        %p426 = pneg %p215
        %p427 = pneg %p244
        %p428 = pneg %p241
        %s429 = sand.u32 %s231, 1
        %s430 = scalar_lea.sflag [#allocation5], %s429
        %s431 = sand.u32 %s231, 1
        %s432 = smul.addr %s431, 16
        %s433 = scalar_lea.vmem [#allocation15], %s432
        %s434 = smul.u32 2, %s29
        %s435 = smul.u32 2, %s29
        %v436 = vld [vmem:[%s375] sm:$0xff]
        %v437 = vld [vmem:[%s375 + $0x8] sm:$0xff]
        %v438 = vld [vmem:[#allocation6] sm:$0x1]
        %v440 = vlaneseq
        %v441 = vshrl.u32 %v440, 7
        %v442 = vsub.s32 0, %v441
        %v443 = vrot.slane %v438, %v442
        %v445 = vmul.f32 %v436, %v443
        %v446 = vmul.f32 %v437, %v443
        %v447 = vld [vmem:[#allocation8] sm:$0x1]
        %v449 = vlaneseq
        %v450 = vshrl.u32 %v449, 7
        %v451 = vsub.s32 0, %v450
        %v452 = vrot.slane %v447, %v451
        %v454 = vadd.f32 %v445, %v452
        %v455 = vadd.f32 %v446, %v452
        %vm456 = vcmp.ge.f32.partialorder %v454, 0.0
        %vm457 = vcmp.ge.f32.partialorder %v455, 0.0
        %v458 = vmul.f32 %v454, 0.01
        %v459 = vmul.f32 %v455, 0.01
        %v460 = vsel %vm456, %v454, %v458
        %v461 = vsel %vm457, %v455, %v459
        %v462 = vld [vmem:[#allocation9] sm:$0xff]
        %v463 = vld [vmem:[#allocation9 + $0x8] sm:$0xff]
        %v464 = vld [vmem:[#allocation9 + $0x10] sm:$0xff]
        %v465 = vld [vmem:[#allocation9 + $0x18] sm:$0xff]
        %v466 = vld [vmem:[#allocation9 + $0x20] sm:$0xff]
        %v467 = vld [vmem:[#allocation9 + $0x28] sm:$0xff]
        %v468 = vld [vmem:[#allocation9 + $0x30] sm:$0xff]
        %v469 = vld [vmem:[#allocation9 + $0x38] sm:$0xff]
        %v470 = vld [vmem:[#allocation9 + $0x40] sm:$0xff]
        %v471 = vld [vmem:[#allocation9 + $0x48] sm:$0xff]
        %v472 = vld [vmem:[#allocation9 + $0x50] sm:$0xff]
        %v473 = vld [vmem:[#allocation9 + $0x58] sm:$0xff]
        %v474 = vld [vmem:[#allocation9 + $0x60] sm:$0xff]
        %v475 = vld [vmem:[#allocation9 + $0x68] sm:$0xff]
        %v476 = vld [vmem:[#allocation9 + $0x70] sm:$0xff]
        %v477 = vld [vmem:[#allocation9 + $0x78] sm:$0xff]
        %v478 = vld [vmem:[#allocation9 + $0x80] sm:$0xff]
        %v479 = vld [vmem:[#allocation9 + $0x88] sm:$0xff]
        %v480 = vld [vmem:[#allocation9 + $0x90] sm:$0xff]
        %v481 = vld [vmem:[#allocation9 + $0x98] sm:$0xff]
        %v482 = vld [vmem:[#allocation9 + $0xa0] sm:$0xff]
        %v483 = vld [vmem:[#allocation9 + $0xa8] sm:$0xff]
        %v484 = vld [vmem:[#allocation9 + $0xb0] sm:$0xff]
        %v485 = vld [vmem:[#allocation9 + $0xb8] sm:$0xff]
        %v486 = vld [vmem:[#allocation9 + $0xc0] sm:$0xff]
        %v487 = vld [vmem:[#allocation9 + $0xc8] sm:$0xff]
        %v488 = vld [vmem:[#allocation9 + $0xd0] sm:$0xff]
        %v489 = vld [vmem:[#allocation9 + $0xd8] sm:$0xff]
        %v490 = vld [vmem:[#allocation9 + $0xe0] sm:$0xff]
        %v491 = vld [vmem:[#allocation9 + $0xe8] sm:$0xff]
        %v492 = vld [vmem:[#allocation9 + $0xf0] sm:$0xff]
        %v493 = vld [vmem:[#allocation9 + $0xf8] sm:$0xff]
        %v494 = vld [vmem:[#allocation9 + $0x100] sm:$0xff]
        %v495 = vld [vmem:[#allocation9 + $0x108] sm:$0xff]
        %v496 = vld [vmem:[#allocation9 + $0x110] sm:$0xff]
        %v497 = vld [vmem:[#allocation9 + $0x118] sm:$0xff]
        %v498 = vld [vmem:[#allocation9 + $0x120] sm:$0xff]
        %v499 = vld [vmem:[#allocation9 + $0x128] sm:$0xff]
        %v500 = vld [vmem:[#allocation9 + $0x130] sm:$0xff]
        %v501 = vld [vmem:[#allocation9 + $0x138] sm:$0xff]
        %v502 = vld [vmem:[#allocation9 + $0x140] sm:$0xff]
        %v503 = vld [vmem:[#allocation9 + $0x148] sm:$0xff]
        %v504 = vld [vmem:[#allocation9 + $0x150] sm:$0xff]
        %v505 = vld [vmem:[#allocation9 + $0x158] sm:$0xff]
        %v506 = vld [vmem:[#allocation9 + $0x160] sm:$0xff]
        %v507 = vld [vmem:[#allocation9 + $0x168] sm:$0xff]
        %v508 = vld [vmem:[#allocation9 + $0x170] sm:$0xff]
        %v509 = vld [vmem:[#allocation9 + $0x178] sm:$0xff]
        %v510 = vld [vmem:[#allocation9 + $0x180] sm:$0xff]
        %v511 = vld [vmem:[#allocation9 + $0x188] sm:$0xff]
        %v512 = vld [vmem:[#allocation9 + $0x190] sm:$0xff]
        %v513 = vld [vmem:[#allocation9 + $0x198] sm:$0xff]
        %v514 = vld [vmem:[#allocation9 + $0x1a0] sm:$0xff]
        %v515 = vld [vmem:[#allocation9 + $0x1a8] sm:$0xff]
        %v516 = vld [vmem:[#allocation9 + $0x1b0] sm:$0xff]
        %v517 = vld [vmem:[#allocation9 + $0x1b8] sm:$0xff]
        %v518 = vld [vmem:[#allocation9 + $0x1c0] sm:$0xff]
        %v519 = vld [vmem:[#allocation9 + $0x1c8] sm:$0xff]
        %v520 = vld [vmem:[#allocation9 + $0x1d0] sm:$0xff]
        %v521 = vld [vmem:[#allocation9 + $0x1d8] sm:$0xff]
        %v522 = vld [vmem:[#allocation9 + $0x1e0] sm:$0xff]
        %v523 = vld [vmem:[#allocation9 + $0x1e8] sm:$0xff]
        %v524 = vld [vmem:[#allocation9 + $0x1f0] sm:$0xff]
        %v525 = vld [vmem:[#allocation9 + $0x1f8] sm:$0xff]
        %v526 = vld [vmem:[#allocation9 + $0x200] sm:$0xff]
        %v527 = vld [vmem:[#allocation9 + $0x208] sm:$0xff]
        %v528 = vld [vmem:[#allocation9 + $0x210] sm:$0xff]
        %v529 = vld [vmem:[#allocation9 + $0x218] sm:$0xff]
        %v530 = vld [vmem:[#allocation9 + $0x220] sm:$0xff]
        %v531 = vld [vmem:[#allocation9 + $0x228] sm:$0xff]
        %v532 = vld [vmem:[#allocation9 + $0x230] sm:$0xff]
        %v533 = vld [vmem:[#allocation9 + $0x238] sm:$0xff]
        %v534 = vld [vmem:[#allocation9 + $0x240] sm:$0xff]
        %v535 = vld [vmem:[#allocation9 + $0x248] sm:$0xff]
        %v536 = vld [vmem:[#allocation9 + $0x250] sm:$0xff]
        %v537 = vld [vmem:[#allocation9 + $0x258] sm:$0xff]
        %v538 = vld [vmem:[#allocation9 + $0x260] sm:$0xff]
        %v539 = vld [vmem:[#allocation9 + $0x268] sm:$0xff]
        %v540 = vld [vmem:[#allocation9 + $0x270] sm:$0xff]
        %v541 = vld [vmem:[#allocation9 + $0x278] sm:$0xff]
        %v542 = vld [vmem:[#allocation9 + $0x280] sm:$0xff]
        %v543 = vld [vmem:[#allocation9 + $0x288] sm:$0xff]
        %v544 = vld [vmem:[#allocation9 + $0x290] sm:$0xff]
        %v545 = vld [vmem:[#allocation9 + $0x298] sm:$0xff]
        %v546 = vld [vmem:[#allocation9 + $0x2a0] sm:$0xff]
        %v547 = vld [vmem:[#allocation9 + $0x2a8] sm:$0xff]
        %v548 = vld [vmem:[#allocation9 + $0x2b0] sm:$0xff]
        %v549 = vld [vmem:[#allocation9 + $0x2b8] sm:$0xff]
        %v550 = vld [vmem:[#allocation9 + $0x2c0] sm:$0xff]
        %v551 = vld [vmem:[#allocation9 + $0x2c8] sm:$0xff]
        %v552 = vld [vmem:[#allocation9 + $0x2d0] sm:$0xff]
        %v553 = vld [vmem:[#allocation9 + $0x2d8] sm:$0xff]
        %v554 = vld [vmem:[#allocation9 + $0x2e0] sm:$0xff]
        %v555 = vld [vmem:[#allocation9 + $0x2e8] sm:$0xff]
        %v556 = vld [vmem:[#allocation9 + $0x2f0] sm:$0xff]
        %v557 = vld [vmem:[#allocation9 + $0x2f8] sm:$0xff]
        %v558 = vld [vmem:[%s4] sm:$0x3f]
        %v560 = vlaneseq
        %v561 = vshrl.u32 %v560, 7
        %v562 = vsub.s32 0, %v561
        %v563 = vrot.slane %v558, %v562
        %v564 = vlaneseq
        %v565 = vshrl.u32 %v564, 7
        %v566 = vsub.s32 1, %v565
        %v567 = vrot.slane %v558, %v566
        %v568 = vlaneseq
        %v569 = vshrl.u32 %v568, 7
        %v570 = vsub.s32 2, %v569
        %v571 = vrot.slane %v558, %v570
        %v572 = vlaneseq
        %v573 = vshrl.u32 %v572, 7
        %v574 = vsub.s32 3, %v573
        %v575 = vrot.slane %v558, %v574
        %v576 = vlaneseq
        %v577 = vshrl.u32 %v576, 7
        %v578 = vsub.s32 4, %v577
        %v579 = vrot.slane %v558, %v578
        %v580 = vlaneseq
        %v581 = vshrl.u32 %v580, 7
        %v582 = vsub.s32 5, %v581
        %v583 = vrot.slane %v558, %v582
        %590 = vmatprep.subr.mxu0 %v553
        %591 = vmatpush1.msra.mxu0 %v552
        %592 = vmatprep.subr.mxu0 %v547
        %593 = vmatpush1.msra.mxu0 %v546
        %594 = vmatprep.subr.mxu0 %v541
        %595 = vmatpush1.msra.mxu0 %v540
        %596 = vmatprep.subr.mxu0 %v535
        %597 = vmatpush1.msra.mxu0 %v534
        %598 = vmatprep.subr.mxu0 %v529
        %599 = vmatpush1.msra.mxu0 %v528
        %600 = vmatprep.subr.mxu0 %v523
        %601 = vmatpush1.msra.mxu0 %v522
        %602 = vmatprep.subr.mxu0 %v517
        %603 = vmatpush1.msra.mxu0 %v516
        %604 = vmatprep.subr.mxu0 %v511
        %605 = vmatpush1.msra.mxu0 %v510
        %606 = vmatprep.subr.mxu0 %v505
        %607 = vmatpush1.msra.mxu0 %v504
        %608 = vmatprep.subr.mxu0 %v499
        %609 = vmatpush1.msra.mxu0 %v498
        %610 = vmatprep.subr.mxu0 %v493
        %611 = vmatpush1.msra.mxu0 %v492
        %612 = vmatprep.subr.mxu0 %v487
        %613 = vmatpush1.msra.mxu0 %v486
        %614 = vmatprep.subr.mxu0 %v481
        %615 = vmatpush1.msra.mxu0 %v480
        %616 = vmatprep.subr.mxu0 %v475
        %617 = vmatpush1.msra.mxu0 %v474
        %618 = vmatprep.subr.mxu0 %v469
        %619 = vmatpush1.msra.mxu0 %v468
        %620 = vmatprep.subr.mxu0 %v463
        %621 = vmatpush1.msra.mxu0 %v462
        %622 = vmatprep.subr.mxu0 0.0
        %623 = vmatpush2.msra.mxu0 0.0
        %624 = vmatprep.subr.mxu0 0.0
        %625 = vmatpush2.msra.mxu0 0.0
        %626 = vmatprep.subr.mxu0 0.0
        %627 = vmatpush2.msra.mxu0 0.0
        %628 = vmatprep.subr.mxu0 0.0
        %629 = vmatpush2.msra.mxu0 0.0
        %630 = vmatprep.subr.mxu0 0.0
        %631 = vmatpush2.msra.mxu0 0.0
        %632 = vmatprep.subr.mxu0 0.0
        %633 = vmatpush2.msra.mxu0 0.0
        %634 = vmatprep.subr.mxu0 0.0
        %635 = vmatpush2.msra.mxu0 0.0
        %636 = vmatprep.subr.mxu0 0.0
        %637 = vmatpush2.msra.mxu0 0.0
        %638 = vmatprep.subr.mxu0 0.0
        %639 = vmatpush2.msra.mxu0 0.0
        %640 = vmatprep.subr.mxu0 0.0
        %641 = vmatpush2.msra.mxu0 0.0
        %642 = vmatprep.subr.mxu0 0.0
        %643 = vmatpush2.msra.mxu0 0.0
        %644 = vmatprep.subr.mxu0 0.0
        %645 = vmatpush2.msra.mxu0 0.0
        %646 = vmatprep.subr.mxu0 0.0
        %647 = vmatpush2.msra.mxu0 0.0
        %648 = vmatprep.subr.mxu0 0.0
        %649 = vmatpush2.msra.mxu0 0.0
        %650 = vmatprep.subr.mxu0 0.0
        %651 = vmatpush2.msra.mxu0 0.0
        %652 = vmatprep.subr.mxu0 0.0
        %653 = vmatpush2.msra.mxu0 0.0
        %654 = vmatprep.mubr.f32.mxu0 0.0
        %655 = vmatmul.mubr.f32.gmra.mxu0 %v460
        %v656 = vpop.f32.mrf.mxu0
        %v657 = vadd.f32 %v563, %v656
        %v658 = vpop.f32.mrf.mxu0
        %v659 = vadd.f32 %v567, %v658
        %660 = vmatprep.mubr.f32.mxu0 0.0
        %661 = vmatmul.mubr.f32.gmra.mxu0 %v461
        %v662 = vpop.f32.mrf.mxu0
        %v663 = vadd.f32 %v563, %v662
        %v664 = vpop.f32.mrf.mxu0
        %v665 = vadd.f32 %v567, %v664
        %666 = vdwg.mxu0
        %667 = vmatprep.subr.mxu0 %v555
        %668 = vmatpush1.msra.mxu0 %v554
        %669 = vmatprep.subr.mxu0 %v549
        %670 = vmatpush1.msra.mxu0 %v548
        %671 = vmatprep.subr.mxu0 %v543
        %672 = vmatpush1.msra.mxu0 %v542
        %673 = vmatprep.subr.mxu0 %v537
        %674 = vmatpush1.msra.mxu0 %v536
        %675 = vmatprep.subr.mxu0 %v531
        %676 = vmatpush1.msra.mxu0 %v530
        %677 = vmatprep.subr.mxu0 %v525
        %678 = vmatpush1.msra.mxu0 %v524
        %679 = vmatprep.subr.mxu0 %v519
        %680 = vmatpush1.msra.mxu0 %v518
        %681 = vmatprep.subr.mxu0 %v513
        %682 = vmatpush1.msra.mxu0 %v512
        %683 = vmatprep.subr.mxu0 %v507
        %684 = vmatpush1.msra.mxu0 %v506
        %685 = vmatprep.subr.mxu0 %v501
        %686 = vmatpush1.msra.mxu0 %v500
        %687 = vmatprep.subr.mxu0 %v495
        %688 = vmatpush1.msra.mxu0 %v494
        %689 = vmatprep.subr.mxu0 %v489
        %690 = vmatpush1.msra.mxu0 %v488
        %691 = vmatprep.subr.mxu0 %v483
        %692 = vmatpush1.msra.mxu0 %v482
        %693 = vmatprep.subr.mxu0 %v477
        %694 = vmatpush1.msra.mxu0 %v476
        %695 = vmatprep.subr.mxu0 %v471
        %696 = vmatpush1.msra.mxu0 %v470
        %697 = vmatprep.subr.mxu0 %v465
        %698 = vmatpush1.msra.mxu0 %v464
        %699 = vmatprep.subr.mxu0 0.0
        %700 = vmatpush2.msra.mxu0 0.0
        %701 = vmatprep.subr.mxu0 0.0
        %702 = vmatpush2.msra.mxu0 0.0
        %703 = vmatprep.subr.mxu0 0.0
        %704 = vmatpush2.msra.mxu0 0.0
        %705 = vmatprep.subr.mxu0 0.0
        %706 = vmatpush2.msra.mxu0 0.0
        %707 = vmatprep.subr.mxu0 0.0
        %708 = vmatpush2.msra.mxu0 0.0
        %709 = vmatprep.subr.mxu0 0.0
        %710 = vmatpush2.msra.mxu0 0.0
        %711 = vmatprep.subr.mxu0 0.0
        %712 = vmatpush2.msra.mxu0 0.0
        %713 = vmatprep.subr.mxu0 0.0
        %714 = vmatpush2.msra.mxu0 0.0
        %715 = vmatprep.subr.mxu0 0.0
        %716 = vmatpush2.msra.mxu0 0.0
        %717 = vmatprep.subr.mxu0 0.0
        %718 = vmatpush2.msra.mxu0 0.0
        %719 = vmatprep.subr.mxu0 0.0
        %720 = vmatpush2.msra.mxu0 0.0
        %721 = vmatprep.subr.mxu0 0.0
        %722 = vmatpush2.msra.mxu0 0.0
        %723 = vmatprep.subr.mxu0 0.0
        %724 = vmatpush2.msra.mxu0 0.0
        %725 = vmatprep.subr.mxu0 0.0
        %726 = vmatpush2.msra.mxu0 0.0
        %727 = vmatprep.subr.mxu0 0.0
        %728 = vmatpush2.msra.mxu0 0.0
        %729 = vmatprep.subr.mxu0 0.0
        %730 = vmatpush2.msra.mxu0 0.0
        %731 = vmatprep.mubr.f32.mxu0 0.0
        %732 = vmatmul.mubr.f32.gmra.mxu0 %v460
        %v733 = vpop.f32.mrf.mxu0
        %v734 = vadd.f32 %v571, %v733
        %v735 = vpop.f32.mrf.mxu0
        %v736 = vadd.f32 %v575, %v735
        %737 = vmatprep.mubr.f32.mxu0 0.0
        %738 = vmatmul.mubr.f32.gmra.mxu0 %v461
        %v739 = vpop.f32.mrf.mxu0
        %v740 = vadd.f32 %v571, %v739
        %v741 = vpop.f32.mrf.mxu0
        %v742 = vadd.f32 %v575, %v741
        %743 = vdwg.mxu0
        %744 = vmatprep.subr.mxu0 %v557
        %745 = vmatpush1.msra.mxu0 %v556
        %746 = vmatprep.subr.mxu0 %v551
        %747 = vmatpush1.msra.mxu0 %v550
        %748 = vmatprep.subr.mxu0 %v545
        %749 = vmatpush1.msra.mxu0 %v544
        %750 = vmatprep.subr.mxu0 %v539
        %751 = vmatpush1.msra.mxu0 %v538
        %752 = vmatprep.subr.mxu0 %v533
        %753 = vmatpush1.msra.mxu0 %v532
        %754 = vmatprep.subr.mxu0 %v527
        %755 = vmatpush1.msra.mxu0 %v526
        %756 = vmatprep.subr.mxu0 %v521
        %757 = vmatpush1.msra.mxu0 %v520
        %758 = vmatprep.subr.mxu0 %v515
        %759 = vmatpush1.msra.mxu0 %v514
        %760 = vmatprep.subr.mxu0 %v509
        %761 = vmatpush1.msra.mxu0 %v508
        %762 = vmatprep.subr.mxu0 %v503
        %763 = vmatpush1.msra.mxu0 %v502
        %764 = vmatprep.subr.mxu0 %v497
        %765 = vmatpush1.msra.mxu0 %v496
        %766 = vmatprep.subr.mxu0 %v491
        %767 = vmatpush1.msra.mxu0 %v490
        %768 = vmatprep.subr.mxu0 %v485
        %769 = vmatpush1.msra.mxu0 %v484
        %770 = vmatprep.subr.mxu0 %v479
        %771 = vmatpush1.msra.mxu0 %v478
        %772 = vmatprep.subr.mxu0 %v473
        %773 = vmatpush1.msra.mxu0 %v472
        %774 = vmatprep.subr.mxu0 %v467
        %775 = vmatpush1.msra.mxu0 %v466
        %776 = vmatprep.subr.mxu0 0.0
        %777 = vmatpush2.msra.mxu0 0.0
        %778 = vmatprep.subr.mxu0 0.0
        %779 = vmatpush2.msra.mxu0 0.0
        %780 = vmatprep.subr.mxu0 0.0
        %781 = vmatpush2.msra.mxu0 0.0
        %782 = vmatprep.subr.mxu0 0.0
        %783 = vmatpush2.msra.mxu0 0.0
        %784 = vmatprep.subr.mxu0 0.0
        %785 = vmatpush2.msra.mxu0 0.0
        %786 = vmatprep.subr.mxu0 0.0
        %787 = vmatpush2.msra.mxu0 0.0
        %788 = vmatprep.subr.mxu0 0.0
        %789 = vmatpush2.msra.mxu0 0.0
        %790 = vmatprep.subr.mxu0 0.0
        %791 = vmatpush2.msra.mxu0 0.0
        %792 = vmatprep.subr.mxu0 0.0
        %793 = vmatpush2.msra.mxu0 0.0
        %794 = vmatprep.subr.mxu0 0.0
        %795 = vmatpush2.msra.mxu0 0.0
        %796 = vmatprep.subr.mxu0 0.0
        %797 = vmatpush2.msra.mxu0 0.0
        %798 = vmatprep.subr.mxu0 0.0
        %799 = vmatpush2.msra.mxu0 0.0
        %800 = vmatprep.subr.mxu0 0.0
        %801 = vmatpush2.msra.mxu0 0.0
        %802 = vmatprep.subr.mxu0 0.0
        %803 = vmatpush2.msra.mxu0 0.0
        %804 = vmatprep.subr.mxu0 0.0
        %805 = vmatpush2.msra.mxu0 0.0
        %806 = vmatprep.subr.mxu0 0.0
        %807 = vmatpush2.msra.mxu0 0.0
        %808 = vmatprep.mubr.f32.mxu0 0.0
        %809 = vmatmul.mubr.f32.gmra.mxu0 %v460
        %v810 = vpop.f32.mrf.mxu0
        %v811 = vadd.f32 %v579, %v810
        %v812 = vpop.f32.mrf.mxu0
        %v813 = vadd.f32 %v583, %v812
        %814 = vmatprep.mubr.f32.mxu0 0.0
        %815 = vmatmul.mubr.f32.gmra.mxu0 %v461
        %v816 = vpop.f32.mrf.mxu0
        %v817 = vadd.f32 %v579, %v816
        %v818 = vpop.f32.mrf.mxu0
        %v819 = vadd.f32 %v583, %v818
        %820 = vdwg.mxu0
        %vm821 = vcmp.ge.f32.partialorder %v657, 0.0
        %vm822 = vcmp.ge.f32.partialorder %v659, 0.0
        %vm823 = vcmp.ge.f32.partialorder %v734, 0.0
        %vm824 = vcmp.ge.f32.partialorder %v736, 0.0
        %vm825 = vcmp.ge.f32.partialorder %v811, 0.0
        %vm826 = vcmp.ge.f32.partialorder %v813, 0.0
        %vm827 = vcmp.ge.f32.partialorder %v663, 0.0
        %vm828 = vcmp.ge.f32.partialorder %v665, 0.0
        %vm829 = vcmp.ge.f32.partialorder %v740, 0.0
        %vm830 = vcmp.ge.f32.partialorder %v742, 0.0
        %vm831 = vcmp.ge.f32.partialorder %v817, 0.0
        %vm832 = vcmp.ge.f32.partialorder %v819, 0.0
        %v833 = vmul.f32 %v657, 0.01
        %v834 = vmul.f32 %v659, 0.01
        %v835 = vmul.f32 %v734, 0.01
        %v836 = vmul.f32 %v736, 0.01
        %v837 = vmul.f32 %v811, 0.01
        %v838 = vmul.f32 %v813, 0.01
        %v839 = vmul.f32 %v663, 0.01
        %v840 = vmul.f32 %v665, 0.01
        %v841 = vmul.f32 %v740, 0.01
        %v842 = vmul.f32 %v742, 0.01
        %v843 = vmul.f32 %v817, 0.01
        %v844 = vmul.f32 %v819, 0.01
        %v845 = vsel %vm821, %v657, %v833
        %v846 = vsel %vm822, %v659, %v834
        %v847 = vsel %vm823, %v734, %v835
        %v848 = vsel %vm824, %v736, %v836
        %v849 = vsel %vm825, %v811, %v837
        %v850 = vsel %vm826, %v813, %v838
        %v851 = vsel %vm827, %v663, %v839
        %v852 = vsel %vm828, %v665, %v840
        %v853 = vsel %vm829, %v740, %v841
        %v854 = vsel %vm830, %v742, %v842
        %v855 = vsel %vm831, %v817, %v843
        %v856 = vsel %vm832, %v819, %v844
        %869 = vrot.lane.b32.xlu0 %v845, 48
        %v870 = vpop.permute.xlu0 %869
        %871 = vrot.lane.b32.xlu0 %v846, 48
        %v872 = vpop.permute.xlu0 %871
        %873 = vrot.lane.b32.xlu0 %v847, 48
        %v874 = vpop.permute.xlu0 %873
        %875 = vrot.lane.b32.xlu0 %v848, 48
        %v876 = vpop.permute.xlu0 %875
        %877 = vrot.lane.b32.xlu0 %v849, 48
        %v878 = vpop.permute.xlu0 %877
        %879 = vrot.lane.b32.xlu0 %v850, 48
        %v880 = vpop.permute.xlu0 %879
        %881 = vrot.lane.b32.xlu0 %v851, 48
        %v882 = vpop.permute.xlu0 %881
        %883 = vrot.lane.b32.xlu0 %v852, 48
        %v884 = vpop.permute.xlu0 %883
        %885 = vrot.lane.b32.xlu0 %v853, 48
        %v886 = vpop.permute.xlu0 %885
        %887 = vrot.lane.b32.xlu0 %v854, 48
        %v888 = vpop.permute.xlu0 %887
        %889 = vrot.lane.b32.xlu0 %v855, 48
        %v890 = vpop.permute.xlu0 %889
        %891 = vrot.lane.b32.xlu0 %v856, 48
        %v892 = vpop.permute.xlu0 %891
        %vm893 = vcmask 392192
        %v894 = vsel %vm893, %v870, %v872
        %v895 = vsel %vm893, %v872, %v874
        %v896 = vsel %vm893, %v874, %v876
        %v897 = vsel %vm893, %v876, %v878
        %v898 = vsel %vm893, %v878, %v880
        %v899 = vsel %vm893, %v882, %v884
        %v900 = vsel %vm893, %v884, %v886
        %v901 = vsel %vm893, %v886, %v888
        %v902 = vsel %vm893, %v888, %v890
        %v903 = vsel %vm893, %v890, %v892
        %v916 = vsel %vm893, 0.0, %v870
        %v917 = vsel %vm893, 0.0, %v882
        %918 = vrot.lane.b32.xlu0 %v845, 80
        %v919 = vpop.permute.xlu0 %918
        %920 = vrot.lane.b32.xlu0 %v846, 80
        %v921 = vpop.permute.xlu0 %920
        %922 = vrot.lane.b32.xlu0 %v847, 80
        %v923 = vpop.permute.xlu0 %922
        %924 = vrot.lane.b32.xlu0 %v848, 80
        %v925 = vpop.permute.xlu0 %924
        %926 = vrot.lane.b32.xlu0 %v849, 80
        %v927 = vpop.permute.xlu0 %926
        %928 = vrot.lane.b32.xlu0 %v850, 80
        %v929 = vpop.permute.xlu0 %928
        %930 = vrot.lane.b32.xlu0 %v851, 80
        %v931 = vpop.permute.xlu0 %930
        %932 = vrot.lane.b32.xlu0 %v852, 80
        %v933 = vpop.permute.xlu0 %932
        %934 = vrot.lane.b32.xlu0 %v853, 80
        %v935 = vpop.permute.xlu0 %934
        %936 = vrot.lane.b32.xlu0 %v854, 80
        %v937 = vpop.permute.xlu0 %936
        %938 = vrot.lane.b32.xlu0 %v855, 80
        %v939 = vpop.permute.xlu0 %938
        %940 = vrot.lane.b32.xlu0 %v856, 80
        %v941 = vpop.permute.xlu0 %940
        %vm942 = vcmask 654336
        %v943 = vsel %vm942, %v919, %v921
        %v944 = vsel %vm942, %v921, %v923
        %v945 = vsel %vm942, %v923, %v925
        %v946 = vsel %vm942, %v925, %v927
        %v947 = vsel %vm942, %v927, %v929
        %v948 = vsel %vm942, %v931, %v933
        %v949 = vsel %vm942, %v933, %v935
        %v950 = vsel %vm942, %v935, %v937
        %v951 = vsel %vm942, %v937, %v939
        %v952 = vsel %vm942, %v939, %v941
        %v965 = vsel %vm942, %v929, 0.0
        %v966 = vsel %vm942, %v941, 0.0
        %v967 = vld [vmem:[#allocation11] ss:$8 sm:$0xf]
        %v968 = vld [vmem:[#allocation11] ss:$8 sm:$0x30]
        %v969 = vor.u32 %v967, %v968
        %v971 = vlaneseq
        %v972 = vshrl.u32 %v971, 7
        %v973 = vsub.s32 0, %v972
        %v974 = vrot.slane %v969, %v973
        %v975 = vlaneseq
        %v976 = vshrl.u32 %v975, 7
        %v977 = vsub.s32 1, %v976
        %v978 = vrot.slane %v969, %v977
        %v979 = vlaneseq
        %v980 = vshrl.u32 %v979, 7
        %v981 = vsub.s32 2, %v980
        %v982 = vrot.slane %v969, %v981
        %v983 = vlaneseq
        %v984 = vshrl.u32 %v983, 7
        %v985 = vsub.s32 3, %v984
        %v986 = vrot.slane %v969, %v985
        %v987 = vlaneseq
        %v988 = vshrl.u32 %v987, 7
        %v989 = vsub.s32 4, %v988
        %v990 = vrot.slane %v969, %v989
        %v991 = vlaneseq
        %v992 = vshrl.u32 %v991, 7
        %v993 = vsub.s32 5, %v992
        %v994 = vrot.slane %v969, %v993
        %v1001 = vmul.f32 %v916, %v974
        %v1002 = vmul.f32 %v894, %v978
        %v1003 = vmul.f32 %v895, %v982
        %v1004 = vmul.f32 %v896, %v986
        %v1005 = vmul.f32 %v897, %v990
        %v1006 = vmul.f32 %v898, %v994
        %v1007 = vmul.f32 %v917, %v974
        %v1008 = vmul.f32 %v899, %v978
        %v1009 = vmul.f32 %v900, %v982
        %v1010 = vmul.f32 %v901, %v986
        %v1011 = vmul.f32 %v902, %v990
        %v1012 = vmul.f32 %v903, %v994
        %s1013 = scalar_lea.vmem [#allocation11], 1
        %v1014 = vld [vmem:[%s1013] ss:$8 sm:$0xf]
        %v1015 = vld [vmem:[%s1013] ss:$8 sm:$0x30]
        %v1016 = vor.u32 %v1014, %v1015
        %v1018 = vlaneseq
        %v1019 = vshrl.u32 %v1018, 7
        %v1020 = vsub.s32 0, %v1019
        %v1021 = vrot.slane %v1016, %v1020
        %v1022 = vlaneseq
        %v1023 = vshrl.u32 %v1022, 7
        %v1024 = vsub.s32 1, %v1023
        %v1025 = vrot.slane %v1016, %v1024
        %v1026 = vlaneseq
        %v1027 = vshrl.u32 %v1026, 7
        %v1028 = vsub.s32 2, %v1027
        %v1029 = vrot.slane %v1016, %v1028
        %v1030 = vlaneseq
        %v1031 = vshrl.u32 %v1030, 7
        %v1032 = vsub.s32 3, %v1031
        %v1033 = vrot.slane %v1016, %v1032
        %v1034 = vlaneseq
        %v1035 = vshrl.u32 %v1034, 7
        %v1036 = vsub.s32 4, %v1035
        %v1037 = vrot.slane %v1016, %v1036
        %v1038 = vlaneseq
        %v1039 = vshrl.u32 %v1038, 7
        %v1040 = vsub.s32 5, %v1039
        %v1041 = vrot.slane %v1016, %v1040
        %v1048 = vmul.f32 %v845, %v1021
        %v1049 = vmul.f32 %v846, %v1025
        %v1050 = vmul.f32 %v847, %v1029
        %v1051 = vmul.f32 %v848, %v1033
        %v1052 = vmul.f32 %v849, %v1037
        %v1053 = vmul.f32 %v850, %v1041
        %v1054 = vmul.f32 %v851, %v1021
        %v1055 = vmul.f32 %v852, %v1025
        %v1056 = vmul.f32 %v853, %v1029
        %v1057 = vmul.f32 %v854, %v1033
        %v1058 = vmul.f32 %v855, %v1037
        %v1059 = vmul.f32 %v856, %v1041
        %v1060 = vadd.f32 %v1001, %v1048
        %v1061 = vadd.f32 %v1002, %v1049
        %v1062 = vadd.f32 %v1003, %v1050
        %v1063 = vadd.f32 %v1004, %v1051
        %v1064 = vadd.f32 %v1005, %v1052
        %v1065 = vadd.f32 %v1006, %v1053
        %v1066 = vadd.f32 %v1007, %v1054
        %v1067 = vadd.f32 %v1008, %v1055
        %v1068 = vadd.f32 %v1009, %v1056
        %v1069 = vadd.f32 %v1010, %v1057
        %v1070 = vadd.f32 %v1011, %v1058
        %v1071 = vadd.f32 %v1012, %v1059
        %s1072 = scalar_lea.vmem [#allocation11], 2
        %v1073 = vld [vmem:[%s1072] ss:$8 sm:$0xf]
        %v1074 = vld [vmem:[%s1072] ss:$8 sm:$0x30]
        %v1075 = vor.u32 %v1073, %v1074
        %v1077 = vlaneseq
        %v1078 = vshrl.u32 %v1077, 7
        %v1079 = vsub.s32 0, %v1078
        %v1080 = vrot.slane %v1075, %v1079
        %v1081 = vlaneseq
        %v1082 = vshrl.u32 %v1081, 7
        %v1083 = vsub.s32 1, %v1082
        %v1084 = vrot.slane %v1075, %v1083
        %v1085 = vlaneseq
        %v1086 = vshrl.u32 %v1085, 7
        %v1087 = vsub.s32 2, %v1086
        %v1088 = vrot.slane %v1075, %v1087
        %v1089 = vlaneseq
        %v1090 = vshrl.u32 %v1089, 7
        %v1091 = vsub.s32 3, %v1090
        %v1092 = vrot.slane %v1075, %v1091
        %v1093 = vlaneseq
        %v1094 = vshrl.u32 %v1093, 7
        %v1095 = vsub.s32 4, %v1094
        %v1096 = vrot.slane %v1075, %v1095
        %v1097 = vlaneseq
        %v1098 = vshrl.u32 %v1097, 7
        %v1099 = vsub.s32 5, %v1098
        %v1100 = vrot.slane %v1075, %v1099
        %v1107 = vmul.f32 %v943, %v1080
        %v1108 = vmul.f32 %v944, %v1084
        %v1109 = vmul.f32 %v945, %v1088
        %v1110 = vmul.f32 %v946, %v1092
        %v1111 = vmul.f32 %v947, %v1096
        %v1112 = vmul.f32 %v965, %v1100
        %v1113 = vmul.f32 %v948, %v1080
        %v1114 = vmul.f32 %v949, %v1084
        %v1115 = vmul.f32 %v950, %v1088
        %v1116 = vmul.f32 %v951, %v1092
        %v1117 = vmul.f32 %v952, %v1096
        %v1118 = vmul.f32 %v966, %v1100
        %v1119 = vadd.f32 %v1060, %v1107
        %v1120 = vadd.f32 %v1061, %v1108
        %v1121 = vadd.f32 %v1062, %v1109
        %v1122 = vadd.f32 %v1063, %v1110
        %v1123 = vadd.f32 %v1064, %v1111
        %v1124 = vadd.f32 %v1065, %v1112
        %v1125 = vadd.f32 %v1066, %v1113
        %v1126 = vadd.f32 %v1067, %v1114
        %v1127 = vadd.f32 %v1068, %v1115
        %v1128 = vadd.f32 %v1069, %v1116
        %v1129 = vadd.f32 %v1070, %v1117
        %v1130 = vadd.f32 %v1071, %v1118
        %1131 = vst [vmem:[#allocation2] sm:$0xff] %v1119
        %1132 = vst [vmem:[#allocation2 + $0x8] sm:$0xff] %v1120
        %1133 = vst [vmem:[#allocation2 + $0x10] sm:$0xff] %v1121
        %1134 = vst [vmem:[#allocation2 + $0x18] sm:$0xff] %v1122
        %1135 = vst [vmem:[#allocation2 + $0x20] sm:$0xff] %v1123
        %1136 = vst [vmem:[#allocation2 + $0x28] sm:$0xff] %v1124
        %1137 = vst [vmem:[#allocation2 + $0x30] sm:$0xff] %v1125
        %1138 = vst [vmem:[#allocation2 + $0x38] sm:$0xff] %v1126
        %1139 = vst [vmem:[#allocation2 + $0x40] sm:$0xff] %v1127
        %1140 = vst [vmem:[#allocation2 + $0x48] sm:$0xff] %v1128
        %1141 = vst [vmem:[#allocation2 + $0x50] sm:$0xff] %v1129
        %1142 = vst [vmem:[#allocation2 + $0x58] sm:$0xff] %v1130
        %s1143 = scalar_lea.vmem [#allocation11], 3
        %v1144 = vld [vmem:[%s1143] ss:$8 sm:$0xf]
        %v1145 = vld [vmem:[%s1143] ss:$8 sm:$0x30]
        %v1146 = vor.u32 %v1144, %v1145
        %v1148 = vlaneseq
        %v1149 = vshrl.u32 %v1148, 7
        %v1150 = vsub.s32 0, %v1149
        %v1151 = vrot.slane %v1146, %v1150
        %v1152 = vlaneseq
        %v1153 = vshrl.u32 %v1152, 7
        %v1154 = vsub.s32 1, %v1153
        %v1155 = vrot.slane %v1146, %v1154
        %v1156 = vlaneseq
        %v1157 = vshrl.u32 %v1156, 7
        %v1158 = vsub.s32 2, %v1157
        %v1159 = vrot.slane %v1146, %v1158
        %v1160 = vlaneseq
        %v1161 = vshrl.u32 %v1160, 7
        %v1162 = vsub.s32 3, %v1161
        %v1163 = vrot.slane %v1146, %v1162
        %v1164 = vlaneseq
        %v1165 = vshrl.u32 %v1164, 7
        %v1166 = vsub.s32 4, %v1165
        %v1167 = vrot.slane %v1146, %v1166
        %v1168 = vlaneseq
        %v1169 = vshrl.u32 %v1168, 7
        %v1170 = vsub.s32 5, %v1169
        %v1171 = vrot.slane %v1146, %v1170
        %v1178 = vmul.f32 %v916, %v1151
        %v1179 = vmul.f32 %v894, %v1155
        %v1180 = vmul.f32 %v895, %v1159
        %v1181 = vmul.f32 %v896, %v1163
        %v1182 = vmul.f32 %v897, %v1167
        %v1183 = vmul.f32 %v898, %v1171
        %v1184 = vmul.f32 %v917, %v1151
        %v1185 = vmul.f32 %v899, %v1155
        %v1186 = vmul.f32 %v900, %v1159
        %v1187 = vmul.f32 %v901, %v1163
        %v1188 = vmul.f32 %v902, %v1167
        %v1189 = vmul.f32 %v903, %v1171
        %s1190 = scalar_lea.vmem [#allocation11], 4
        %v1191 = vld [vmem:[%s1190] ss:$8 sm:$0xf]
        %v1192 = vld [vmem:[%s1190] ss:$8 sm:$0x30]
        %v1193 = vor.u32 %v1191, %v1192
        %v1195 = vlaneseq
        %v1196 = vshrl.u32 %v1195, 7
        %v1197 = vsub.s32 0, %v1196
        %v1198 = vrot.slane %v1193, %v1197
        %v1199 = vlaneseq
        %v1200 = vshrl.u32 %v1199, 7
        %v1201 = vsub.s32 1, %v1200
        %v1202 = vrot.slane %v1193, %v1201
        %v1203 = vlaneseq
        %v1204 = vshrl.u32 %v1203, 7
        %v1205 = vsub.s32 2, %v1204
        %v1206 = vrot.slane %v1193, %v1205
        %v1207 = vlaneseq
        %v1208 = vshrl.u32 %v1207, 7
        %v1209 = vsub.s32 3, %v1208
        %v1210 = vrot.slane %v1193, %v1209
        %v1211 = vlaneseq
        %v1212 = vshrl.u32 %v1211, 7
        %v1213 = vsub.s32 4, %v1212
        %v1214 = vrot.slane %v1193, %v1213
        %v1215 = vlaneseq
        %v1216 = vshrl.u32 %v1215, 7
        %v1217 = vsub.s32 5, %v1216
        %v1218 = vrot.slane %v1193, %v1217
        %v1225 = vmul.f32 %v845, %v1198
        %v1226 = vmul.f32 %v846, %v1202
        %v1227 = vmul.f32 %v847, %v1206
        %v1228 = vmul.f32 %v848, %v1210
        %v1229 = vmul.f32 %v849, %v1214
        %v1230 = vmul.f32 %v850, %v1218
        %v1231 = vmul.f32 %v851, %v1198
        %v1232 = vmul.f32 %v852, %v1202
        %v1233 = vmul.f32 %v853, %v1206
        %v1234 = vmul.f32 %v854, %v1210
        %v1235 = vmul.f32 %v855, %v1214
        %v1236 = vmul.f32 %v856, %v1218
        %v1237 = vadd.f32 %v1178, %v1225
        %v1238 = vadd.f32 %v1179, %v1226
        %v1239 = vadd.f32 %v1180, %v1227
        %v1240 = vadd.f32 %v1181, %v1228
        %v1241 = vadd.f32 %v1182, %v1229
        %v1242 = vadd.f32 %v1183, %v1230
        %v1243 = vadd.f32 %v1184, %v1231
        %v1244 = vadd.f32 %v1185, %v1232
        %v1245 = vadd.f32 %v1186, %v1233
        %v1246 = vadd.f32 %v1187, %v1234
        %v1247 = vadd.f32 %v1188, %v1235
        %v1248 = vadd.f32 %v1189, %v1236
        %s1249 = scalar_lea.vmem [#allocation11], 5
        %v1250 = vld [vmem:[%s1249] ss:$8 sm:$0xf]
        %v1251 = vld [vmem:[%s1249] ss:$8 sm:$0x30]
        %v1252 = vor.u32 %v1250, %v1251
        %v1254 = vlaneseq
        %v1255 = vshrl.u32 %v1254, 7
        %v1256 = vsub.s32 0, %v1255
        %v1257 = vrot.slane %v1252, %v1256
        %v1258 = vlaneseq
        %v1259 = vshrl.u32 %v1258, 7
        %v1260 = vsub.s32 1, %v1259
        %v1261 = vrot.slane %v1252, %v1260
        %v1262 = vlaneseq
        %v1263 = vshrl.u32 %v1262, 7
        %v1264 = vsub.s32 2, %v1263
        %v1265 = vrot.slane %v1252, %v1264
        %v1266 = vlaneseq
        %v1267 = vshrl.u32 %v1266, 7
        %v1268 = vsub.s32 3, %v1267
        %v1269 = vrot.slane %v1252, %v1268
        %v1270 = vlaneseq
        %v1271 = vshrl.u32 %v1270, 7
        %v1272 = vsub.s32 4, %v1271
        %v1273 = vrot.slane %v1252, %v1272
        %v1274 = vlaneseq
        %v1275 = vshrl.u32 %v1274, 7
        %v1276 = vsub.s32 5, %v1275
        %v1277 = vrot.slane %v1252, %v1276
        %v1284 = vmul.f32 %v943, %v1257
        %v1285 = vmul.f32 %v944, %v1261
        %v1286 = vmul.f32 %v945, %v1265
        %v1287 = vmul.f32 %v946, %v1269
        %v1288 = vmul.f32 %v947, %v1273
        %v1289 = vmul.f32 %v965, %v1277
        %v1290 = vmul.f32 %v948, %v1257
        %v1291 = vmul.f32 %v949, %v1261
        %v1292 = vmul.f32 %v950, %v1265
        %v1293 = vmul.f32 %v951, %v1269
        %v1294 = vmul.f32 %v952, %v1273
        %v1295 = vmul.f32 %v966, %v1277
        %v1296 = vadd.f32 %v1237, %v1284
        %v1297 = vadd.f32 %v1238, %v1285
        %v1298 = vadd.f32 %v1239, %v1286
        %v1299 = vadd.f32 %v1240, %v1287
        %v1300 = vadd.f32 %v1241, %v1288
        %v1301 = vadd.f32 %v1242, %v1289
        %v1302 = vadd.f32 %v1243, %v1290
        %v1303 = vadd.f32 %v1244, %v1291
        %v1304 = vadd.f32 %v1245, %v1292
        %v1305 = vadd.f32 %v1246, %v1293
        %v1306 = vadd.f32 %v1247, %v1294
        %v1307 = vadd.f32 %v1248, %v1295
        %1308 = vst [vmem:[#allocation2 + $0x60] sm:$0xff] %v1296
        %1309 = vst [vmem:[#allocation2 + $0x68] sm:$0xff] %v1297
        %1310 = vst [vmem:[#allocation2 + $0x70] sm:$0xff] %v1298
        %1311 = vst [vmem:[#allocation2 + $0x78] sm:$0xff] %v1299
        %1312 = vst [vmem:[#allocation2 + $0x80] sm:$0xff] %v1300
        %1313 = vst [vmem:[#allocation2 + $0x88] sm:$0xff] %v1301
        %1314 = vst [vmem:[#allocation2 + $0x90] sm:$0xff] %v1302
        %1315 = vst [vmem:[#allocation2 + $0x98] sm:$0xff] %v1303
        %1316 = vst [vmem:[#allocation2 + $0xa0] sm:$0xff] %v1304
        %1317 = vst [vmem:[#allocation2 + $0xa8] sm:$0xff] %v1305
        %1318 = vst [vmem:[#allocation2 + $0xb0] sm:$0xff] %v1306
        %1319 = vst [vmem:[#allocation2 + $0xb8] sm:$0xff] %v1307
        %s1320 = scalar_lea.vmem [#allocation11], 6
        %v1321 = vld [vmem:[%s1320] ss:$8 sm:$0xf]
        %v1322 = vld [vmem:[%s1320] ss:$8 sm:$0x30]
        %v1323 = vor.u32 %v1321, %v1322
        %v1325 = vlaneseq
        %v1326 = vshrl.u32 %v1325, 7
        %v1327 = vsub.s32 0, %v1326
        %v1328 = vrot.slane %v1323, %v1327
        %v1329 = vlaneseq
        %v1330 = vshrl.u32 %v1329, 7
        %v1331 = vsub.s32 1, %v1330
        %v1332 = vrot.slane %v1323, %v1331
        %v1333 = vlaneseq
        %v1334 = vshrl.u32 %v1333, 7
        %v1335 = vsub.s32 2, %v1334
        %v1336 = vrot.slane %v1323, %v1335
        %v1337 = vlaneseq
        %v1338 = vshrl.u32 %v1337, 7
        %v1339 = vsub.s32 3, %v1338
        %v1340 = vrot.slane %v1323, %v1339
        %v1341 = vlaneseq
        %v1342 = vshrl.u32 %v1341, 7
        %v1343 = vsub.s32 4, %v1342
        %v1344 = vrot.slane %v1323, %v1343
        %v1345 = vlaneseq
        %v1346 = vshrl.u32 %v1345, 7
        %v1347 = vsub.s32 5, %v1346
        %v1348 = vrot.slane %v1323, %v1347
        %v1355 = vmul.f32 %v916, %v1328
        %v1356 = vmul.f32 %v894, %v1332
        %v1357 = vmul.f32 %v895, %v1336
        %v1358 = vmul.f32 %v896, %v1340
        %v1359 = vmul.f32 %v897, %v1344
        %v1360 = vmul.f32 %v898, %v1348
        %v1361 = vmul.f32 %v917, %v1328
        %v1362 = vmul.f32 %v899, %v1332
        %v1363 = vmul.f32 %v900, %v1336
        %v1364 = vmul.f32 %v901, %v1340
        %v1365 = vmul.f32 %v902, %v1344
        %v1366 = vmul.f32 %v903, %v1348
        %s1367 = scalar_lea.vmem [#allocation11], 7
        %v1368 = vld [vmem:[%s1367] ss:$8 sm:$0xf]
        %v1369 = vld [vmem:[%s1367] ss:$8 sm:$0x30]
        %v1370 = vor.u32 %v1368, %v1369
        %v1372 = vlaneseq
        %v1373 = vshrl.u32 %v1372, 7
        %v1374 = vsub.s32 0, %v1373
        %v1375 = vrot.slane %v1370, %v1374
        %v1376 = vlaneseq
        %v1377 = vshrl.u32 %v1376, 7
        %v1378 = vsub.s32 1, %v1377
        %v1379 = vrot.slane %v1370, %v1378
        %v1380 = vlaneseq
        %v1381 = vshrl.u32 %v1380, 7
        %v1382 = vsub.s32 2, %v1381
        %v1383 = vrot.slane %v1370, %v1382
        %v1384 = vlaneseq
        %v1385 = vshrl.u32 %v1384, 7
        %v1386 = vsub.s32 3, %v1385
        %v1387 = vrot.slane %v1370, %v1386
        %v1388 = vlaneseq
        %v1389 = vshrl.u32 %v1388, 7
        %v1390 = vsub.s32 4, %v1389
        %v1391 = vrot.slane %v1370, %v1390
        %v1392 = vlaneseq
        %v1393 = vshrl.u32 %v1392, 7
        %v1394 = vsub.s32 5, %v1393
        %v1395 = vrot.slane %v1370, %v1394
        %v1402 = vmul.f32 %v845, %v1375
        %v1403 = vmul.f32 %v846, %v1379
        %v1404 = vmul.f32 %v847, %v1383
        %v1405 = vmul.f32 %v848, %v1387
        %v1406 = vmul.f32 %v849, %v1391
        %v1407 = vmul.f32 %v850, %v1395
        %v1408 = vmul.f32 %v851, %v1375
        %v1409 = vmul.f32 %v852, %v1379
        %v1410 = vmul.f32 %v853, %v1383
        %v1411 = vmul.f32 %v854, %v1387
        %v1412 = vmul.f32 %v855, %v1391
        %v1413 = vmul.f32 %v856, %v1395
        %v1414 = vadd.f32 %v1355, %v1402
        %v1415 = vadd.f32 %v1356, %v1403
        %v1416 = vadd.f32 %v1357, %v1404
        %v1417 = vadd.f32 %v1358, %v1405
        %v1418 = vadd.f32 %v1359, %v1406
        %v1419 = vadd.f32 %v1360, %v1407
        %v1420 = vadd.f32 %v1361, %v1408
        %v1421 = vadd.f32 %v1362, %v1409
        %v1422 = vadd.f32 %v1363, %v1410
        %v1423 = vadd.f32 %v1364, %v1411
        %v1424 = vadd.f32 %v1365, %v1412
        %v1425 = vadd.f32 %v1366, %v1413
        %s1426 = scalar_lea.vmem [#allocation11], 48
        %v1427 = vld [vmem:[%s1426] ss:$8 sm:$0xf]
        %v1428 = vld [vmem:[%s1426] ss:$8 sm:$0x30]
        %v1429 = vor.u32 %v1427, %v1428
        %v1431 = vlaneseq
        %v1432 = vshrl.u32 %v1431, 7
        %v1433 = vsub.s32 0, %v1432
        %v1434 = vrot.slane %v1429, %v1433
        %v1435 = vlaneseq
        %v1436 = vshrl.u32 %v1435, 7
        %v1437 = vsub.s32 1, %v1436
        %v1438 = vrot.slane %v1429, %v1437
        %v1439 = vlaneseq
        %v1440 = vshrl.u32 %v1439, 7
        %v1441 = vsub.s32 2, %v1440
        %v1442 = vrot.slane %v1429, %v1441
        %v1443 = vlaneseq
        %v1444 = vshrl.u32 %v1443, 7
        %v1445 = vsub.s32 3, %v1444
        %v1446 = vrot.slane %v1429, %v1445
        %v1447 = vlaneseq
        %v1448 = vshrl.u32 %v1447, 7
        %v1449 = vsub.s32 4, %v1448
        %v1450 = vrot.slane %v1429, %v1449
        %v1451 = vlaneseq
        %v1452 = vshrl.u32 %v1451, 7
        %v1453 = vsub.s32 5, %v1452
        %v1454 = vrot.slane %v1429, %v1453
        %v1461 = vmul.f32 %v943, %v1434
        %v1462 = vmul.f32 %v944, %v1438
        %v1463 = vmul.f32 %v945, %v1442
        %v1464 = vmul.f32 %v946, %v1446
        %v1465 = vmul.f32 %v947, %v1450
        %v1466 = vmul.f32 %v965, %v1454
        %v1467 = vmul.f32 %v948, %v1434
        %v1468 = vmul.f32 %v949, %v1438
        %v1469 = vmul.f32 %v950, %v1442
        %v1470 = vmul.f32 %v951, %v1446
        %v1471 = vmul.f32 %v952, %v1450
        %v1472 = vmul.f32 %v966, %v1454
        %v1473 = vadd.f32 %v1414, %v1461
        %v1474 = vadd.f32 %v1415, %v1462
        %v1475 = vadd.f32 %v1416, %v1463
        %v1476 = vadd.f32 %v1417, %v1464
        %v1477 = vadd.f32 %v1418, %v1465
        %v1478 = vadd.f32 %v1419, %v1466
        %v1479 = vadd.f32 %v1420, %v1467
        %v1480 = vadd.f32 %v1421, %v1468
        %v1481 = vadd.f32 %v1422, %v1469
        %v1482 = vadd.f32 %v1423, %v1470
        %v1483 = vadd.f32 %v1424, %v1471
        %v1484 = vadd.f32 %v1425, %v1472
        %1485 = vst [vmem:[#allocation2 + $0xc0] sm:$0xff] %v1473
        %1486 = vst [vmem:[#allocation2 + $0xc8] sm:$0xff] %v1474
        %1487 = vst [vmem:[#allocation2 + $0xd0] sm:$0xff] %v1475
        %1488 = vst [vmem:[#allocation2 + $0xd8] sm:$0xff] %v1476
        %1489 = vst [vmem:[#allocation2 + $0xe0] sm:$0xff] %v1477
        %1490 = vst [vmem:[#allocation2 + $0xe8] sm:$0xff] %v1478
        %1491 = vst [vmem:[#allocation2 + $0xf0] sm:$0xff] %v1479
        %1492 = vst [vmem:[#allocation2 + $0xf8] sm:$0xff] %v1480
        %1493 = vst [vmem:[#allocation2 + $0x100] sm:$0xff] %v1481
        %1494 = vst [vmem:[#allocation2 + $0x108] sm:$0xff] %v1482
        %1495 = vst [vmem:[#allocation2 + $0x110] sm:$0xff] %v1483
        %1496 = vst [vmem:[#allocation2 + $0x118] sm:$0xff] %v1484
        %v1497 = vld [vmem:[#allocation12] sm:$0xff]
        %v1498 = vld [vmem:[#allocation12 + $0x8] sm:$0xff]
        %v1499 = vld [vmem:[#allocation2] sm:$0xff]
        %v1500 = vld [vmem:[#allocation2 + $0x8] sm:$0xff]
        %v1501 = vld [vmem:[#allocation2 + $0x10] sm:$0xff]
        %v1502 = vld [vmem:[#allocation2 + $0x18] sm:$0xff]
        %v1503 = vld [vmem:[#allocation2 + $0x20] sm:$0xff]
        %v1504 = vld [vmem:[#allocation2 + $0x28] sm:$0xff]
        %v1505 = vld [vmem:[#allocation2 + $0x30] sm:$0xff]
        %v1506 = vld [vmem:[#allocation2 + $0x38] sm:$0xff]
        %v1507 = vld [vmem:[#allocation2 + $0x40] sm:$0xff]
        %v1508 = vld [vmem:[#allocation2 + $0x48] sm:$0xff]
        %v1509 = vld [vmem:[#allocation2 + $0x50] sm:$0xff]
        %v1510 = vld [vmem:[#allocation2 + $0x58] sm:$0xff]
        %v1511 = vld [vmem:[#allocation2 + $0x60] sm:$0xff]
        %v1512 = vld [vmem:[#allocation2 + $0x68] sm:$0xff]
        %v1513 = vld [vmem:[#allocation2 + $0x70] sm:$0xff]
        %v1514 = vld [vmem:[#allocation2 + $0x78] sm:$0xff]
        %v1515 = vld [vmem:[#allocation2 + $0x80] sm:$0xff]
        %v1516 = vld [vmem:[#allocation2 + $0x88] sm:$0xff]
        %v1517 = vld [vmem:[#allocation2 + $0x90] sm:$0xff]
        %v1518 = vld [vmem:[#allocation2 + $0x98] sm:$0xff]
        %v1519 = vld [vmem:[#allocation2 + $0xa0] sm:$0xff]
        %v1520 = vld [vmem:[#allocation2 + $0xa8] sm:$0xff]
        %v1521 = vld [vmem:[#allocation2 + $0xb0] sm:$0xff]
        %v1522 = vld [vmem:[#allocation2 + $0xb8] sm:$0xff]
        %v1523 = vld [vmem:[#allocation2 + $0xc0] sm:$0xff]
        %v1524 = vld [vmem:[#allocation2 + $0xc8] sm:$0xff]
        %v1525 = vld [vmem:[#allocation2 + $0xd0] sm:$0xff]
        %v1526 = vld [vmem:[#allocation2 + $0xd8] sm:$0xff]
        %v1527 = vld [vmem:[#allocation2 + $0xe0] sm:$0xff]
        %v1528 = vld [vmem:[#allocation2 + $0xe8] sm:$0xff]
        %v1529 = vld [vmem:[#allocation2 + $0xf0] sm:$0xff]
        %v1530 = vld [vmem:[#allocation2 + $0xf8] sm:$0xff]
        %v1531 = vld [vmem:[#allocation2 + $0x100] sm:$0xff]
        %v1532 = vld [vmem:[#allocation2 + $0x108] sm:$0xff]
        %v1533 = vld [vmem:[#allocation2 + $0x110] sm:$0xff]
        %v1534 = vld [vmem:[#allocation2 + $0x118] sm:$0xff]
        %v1535 = vld [vmem:[%s7] sm:$0x3f]
        %v1537 = vlaneseq
        %v1538 = vshrl.u32 %v1537, 7
        %v1539 = vsub.s32 0, %v1538
        %v1540 = vrot.slane %v1535, %v1539
        %v1541 = vlaneseq
        %v1542 = vshrl.u32 %v1541, 7
        %v1543 = vsub.s32 1, %v1542
        %v1544 = vrot.slane %v1535, %v1543
        %v1545 = vlaneseq
        %v1546 = vshrl.u32 %v1545, 7
        %v1547 = vsub.s32 2, %v1546
        %v1548 = vrot.slane %v1535, %v1547
        %v1549 = vlaneseq
        %v1550 = vshrl.u32 %v1549, 7
        %v1551 = vsub.s32 3, %v1550
        %v1552 = vrot.slane %v1535, %v1551
        %v1553 = vlaneseq
        %v1554 = vshrl.u32 %v1553, 7
        %v1555 = vsub.s32 4, %v1554
        %v1556 = vrot.slane %v1535, %v1555
        %v1557 = vlaneseq
        %v1558 = vshrl.u32 %v1557, 7
        %v1559 = vsub.s32 5, %v1558
        %v1560 = vrot.slane %v1535, %v1559
        %v1568 = vsel %vm893, %v1497, 0
        %v1571 = vsel %vm893, %v1498, 0
        %1573 = vmatprep.subr.mxu0 0.0
        %1574 = vmatpush1.msra.mxu0 0.0
        %1575 = vmatprep.subr.mxu0 0.0
        %1576 = vmatpush1.msra.mxu0 0.0
        %1577 = vmatprep.subr.mxu0 0.0
        %1578 = vmatpush1.msra.mxu0 0.0
        %1579 = vmatprep.subr.mxu0 0.0
        %1580 = vmatpush1.msra.mxu0 0.0
        %1581 = vmatprep.subr.mxu0 0.0
        %1582 = vmatpush1.msra.mxu0 0.0
        %1583 = vmatprep.subr.mxu0 0.0
        %1584 = vmatpush1.msra.mxu0 0.0
        %1585 = vmatprep.subr.mxu0 0.0
        %1586 = vmatpush1.msra.mxu0 0.0
        %1587 = vmatprep.subr.mxu0 0.0
        %1588 = vmatpush1.msra.mxu0 0.0
        %1589 = vmatprep.subr.mxu0 0.0
        %1590 = vmatpush1.msra.mxu0 0.0
        %1591 = vmatprep.subr.mxu0 0.0
        %1592 = vmatpush1.msra.mxu0 0.0
        %1593 = vmatprep.subr.mxu0 %v1530
        %1594 = vmatpush1.msra.mxu0 %v1529
        %1595 = vmatprep.subr.mxu0 %v1524
        %1596 = vmatpush1.msra.mxu0 %v1523
        %1597 = vmatprep.subr.mxu0 %v1518
        %1598 = vmatpush1.msra.mxu0 %v1517
        %1599 = vmatprep.subr.mxu0 %v1512
        %1600 = vmatpush1.msra.mxu0 %v1511
        %1601 = vmatprep.subr.mxu0 %v1506
        %1602 = vmatpush1.msra.mxu0 %v1505
        %1603 = vmatprep.subr.mxu0 %v1500
        %1604 = vmatpush1.msra.mxu0 %v1499
        %1605 = vmatprep.subr.mxu0 0.0
        %1606 = vmatpush2.msra.mxu0 0.0
        %1607 = vmatprep.subr.mxu0 0.0
        %1608 = vmatpush2.msra.mxu0 0.0
        %1609 = vmatprep.subr.mxu0 0.0
        %1610 = vmatpush2.msra.mxu0 0.0
        %1611 = vmatprep.subr.mxu0 0.0
        %1612 = vmatpush2.msra.mxu0 0.0
        %1613 = vmatprep.subr.mxu0 0.0
        %1614 = vmatpush2.msra.mxu0 0.0
        %1615 = vmatprep.subr.mxu0 0.0
        %1616 = vmatpush2.msra.mxu0 0.0
        %1617 = vmatprep.subr.mxu0 0.0
        %1618 = vmatpush2.msra.mxu0 0.0
        %1619 = vmatprep.subr.mxu0 0.0
        %1620 = vmatpush2.msra.mxu0 0.0
        %1621 = vmatprep.subr.mxu0 0.0
        %1622 = vmatpush2.msra.mxu0 0.0
        %1623 = vmatprep.subr.mxu0 0.0
        %1624 = vmatpush2.msra.mxu0 0.0
        %1625 = vmatprep.subr.mxu0 0.0
        %1626 = vmatpush2.msra.mxu0 0.0
        %1627 = vmatprep.subr.mxu0 0.0
        %1628 = vmatpush2.msra.mxu0 0.0
        %1629 = vmatprep.subr.mxu0 0.0
        %1630 = vmatpush2.msra.mxu0 0.0
        %1631 = vmatprep.subr.mxu0 0.0
        %1632 = vmatpush2.msra.mxu0 0.0
        %1633 = vmatprep.subr.mxu0 0.0
        %1634 = vmatpush2.msra.mxu0 0.0
        %1635 = vmatprep.subr.mxu0 0.0
        %1636 = vmatpush2.msra.mxu0 0.0
        %1637 = vmatprep.mubr.f32.mxu0 0.0
        %1638 = vmatmul.mubr.f32.gmra.mxu0 %v1568
        %v1639 = vpop.f32.mrf.mxu0
        %v1640 = vadd.f32 %v1540, %v1639
        %v1641 = vpop.f32.mrf.mxu0
        %v1642 = vadd.f32 %v1544, %v1641
        %1643 = vmatprep.mubr.f32.mxu0 0.0
        %1644 = vmatmul.mubr.f32.gmra.mxu0 %v1571
        %v1645 = vpop.f32.mrf.mxu0
        %v1646 = vadd.f32 %v1540, %v1645
        %v1647 = vpop.f32.mrf.mxu0
        %v1648 = vadd.f32 %v1544, %v1647
        %1649 = vdwg.mxu0
        %1650 = vmatprep.subr.mxu0 0.0
        %1651 = vmatpush1.msra.mxu0 0.0
        %1652 = vmatprep.subr.mxu0 0.0
        %1653 = vmatpush1.msra.mxu0 0.0
        %1654 = vmatprep.subr.mxu0 0.0
        %1655 = vmatpush1.msra.mxu0 0.0
        %1656 = vmatprep.subr.mxu0 0.0
        %1657 = vmatpush1.msra.mxu0 0.0
        %1658 = vmatprep.subr.mxu0 0.0
        %1659 = vmatpush1.msra.mxu0 0.0
        %1660 = vmatprep.subr.mxu0 0.0
        %1661 = vmatpush1.msra.mxu0 0.0
        %1662 = vmatprep.subr.mxu0 0.0
        %1663 = vmatpush1.msra.mxu0 0.0
        %1664 = vmatprep.subr.mxu0 0.0
        %1665 = vmatpush1.msra.mxu0 0.0
        %1666 = vmatprep.subr.mxu0 0.0
        %1667 = vmatpush1.msra.mxu0 0.0
        %1668 = vmatprep.subr.mxu0 0.0
        %1669 = vmatpush1.msra.mxu0 0.0
        %1670 = vmatprep.subr.mxu0 %v1532
        %1671 = vmatpush1.msra.mxu0 %v1531
        %1672 = vmatprep.subr.mxu0 %v1526
        %1673 = vmatpush1.msra.mxu0 %v1525
        %1674 = vmatprep.subr.mxu0 %v1520
        %1675 = vmatpush1.msra.mxu0 %v1519
        %1676 = vmatprep.subr.mxu0 %v1514
        %1677 = vmatpush1.msra.mxu0 %v1513
        %1678 = vmatprep.subr.mxu0 %v1508
        %1679 = vmatpush1.msra.mxu0 %v1507
        %1680 = vmatprep.subr.mxu0 %v1502
        %1681 = vmatpush1.msra.mxu0 %v1501
        %1682 = vmatprep.subr.mxu0 0.0
        %1683 = vmatpush2.msra.mxu0 0.0
        %1684 = vmatprep.subr.mxu0 0.0
        %1685 = vmatpush2.msra.mxu0 0.0
        %1686 = vmatprep.subr.mxu0 0.0
        %1687 = vmatpush2.msra.mxu0 0.0
        %1688 = vmatprep.subr.mxu0 0.0
        %1689 = vmatpush2.msra.mxu0 0.0
        %1690 = vmatprep.subr.mxu0 0.0
        %1691 = vmatpush2.msra.mxu0 0.0
        %1692 = vmatprep.subr.mxu0 0.0
        %1693 = vmatpush2.msra.mxu0 0.0
        %1694 = vmatprep.subr.mxu0 0.0
        %1695 = vmatpush2.msra.mxu0 0.0
        %1696 = vmatprep.subr.mxu0 0.0
        %1697 = vmatpush2.msra.mxu0 0.0
        %1698 = vmatprep.subr.mxu0 0.0
        %1699 = vmatpush2.msra.mxu0 0.0
        %1700 = vmatprep.subr.mxu0 0.0
        %1701 = vmatpush2.msra.mxu0 0.0
        %1702 = vmatprep.subr.mxu0 0.0
        %1703 = vmatpush2.msra.mxu0 0.0
        %1704 = vmatprep.subr.mxu0 0.0
        %1705 = vmatpush2.msra.mxu0 0.0
        %1706 = vmatprep.subr.mxu0 0.0
        %1707 = vmatpush2.msra.mxu0 0.0
        %1708 = vmatprep.subr.mxu0 0.0
        %1709 = vmatpush2.msra.mxu0 0.0
        %1710 = vmatprep.subr.mxu0 0.0
        %1711 = vmatpush2.msra.mxu0 0.0
        %1712 = vmatprep.subr.mxu0 0.0
        %1713 = vmatpush2.msra.mxu0 0.0
        %1714 = vmatprep.mubr.f32.mxu0 0.0
        %1715 = vmatmul.mubr.f32.gmra.mxu0 %v1568
        %v1716 = vpop.f32.mrf.mxu0
        %v1717 = vadd.f32 %v1548, %v1716
        %v1718 = vpop.f32.mrf.mxu0
        %v1719 = vadd.f32 %v1552, %v1718
        %1720 = vmatprep.mubr.f32.mxu0 0.0
        %1721 = vmatmul.mubr.f32.gmra.mxu0 %v1571
        %v1722 = vpop.f32.mrf.mxu0
        %v1723 = vadd.f32 %v1548, %v1722
        %v1724 = vpop.f32.mrf.mxu0
        %v1725 = vadd.f32 %v1552, %v1724
        %1726 = vdwg.mxu0
        %1727 = vmatprep.subr.mxu0 0.0
        %1728 = vmatpush1.msra.mxu0 0.0
        %1729 = vmatprep.subr.mxu0 0.0
        %1730 = vmatpush1.msra.mxu0 0.0
        %1731 = vmatprep.subr.mxu0 0.0
        %1732 = vmatpush1.msra.mxu0 0.0
        %1733 = vmatprep.subr.mxu0 0.0
        %1734 = vmatpush1.msra.mxu0 0.0
        %1735 = vmatprep.subr.mxu0 0.0
        %1736 = vmatpush1.msra.mxu0 0.0
        %1737 = vmatprep.subr.mxu0 0.0
        %1738 = vmatpush1.msra.mxu0 0.0
        %1739 = vmatprep.subr.mxu0 0.0
        %1740 = vmatpush1.msra.mxu0 0.0
        %1741 = vmatprep.subr.mxu0 0.0
        %1742 = vmatpush1.msra.mxu0 0.0
        %1743 = vmatprep.subr.mxu0 0.0
        %1744 = vmatpush1.msra.mxu0 0.0
        %1745 = vmatprep.subr.mxu0 0.0
        %1746 = vmatpush1.msra.mxu0 0.0
        %1747 = vmatprep.subr.mxu0 %v1534
        %1748 = vmatpush1.msra.mxu0 %v1533
        %1749 = vmatprep.subr.mxu0 %v1528
        %1750 = vmatpush1.msra.mxu0 %v1527
        %1751 = vmatprep.subr.mxu0 %v1522
        %1752 = vmatpush1.msra.mxu0 %v1521
        %1753 = vmatprep.subr.mxu0 %v1516
        %1754 = vmatpush1.msra.mxu0 %v1515
        %1755 = vmatprep.subr.mxu0 %v1510
        %1756 = vmatpush1.msra.mxu0 %v1509
        %1757 = vmatprep.subr.mxu0 %v1504
        %1758 = vmatpush1.msra.mxu0 %v1503
        %1759 = vmatprep.subr.mxu0 0.0
        %1760 = vmatpush2.msra.mxu0 0.0
        %1761 = vmatprep.subr.mxu0 0.0
        %1762 = vmatpush2.msra.mxu0 0.0
        %1763 = vmatprep.subr.mxu0 0.0
        %1764 = vmatpush2.msra.mxu0 0.0
        %1765 = vmatprep.subr.mxu0 0.0
        %1766 = vmatpush2.msra.mxu0 0.0
        %1767 = vmatprep.subr.mxu0 0.0
        %1768 = vmatpush2.msra.mxu0 0.0
        %1769 = vmatprep.subr.mxu0 0.0
        %1770 = vmatpush2.msra.mxu0 0.0
        %1771 = vmatprep.subr.mxu0 0.0
        %1772 = vmatpush2.msra.mxu0 0.0
        %1773 = vmatprep.subr.mxu0 0.0
        %1774 = vmatpush2.msra.mxu0 0.0
        %1775 = vmatprep.subr.mxu0 0.0
        %1776 = vmatpush2.msra.mxu0 0.0
        %1777 = vmatprep.subr.mxu0 0.0
        %1778 = vmatpush2.msra.mxu0 0.0
        %1779 = vmatprep.subr.mxu0 0.0
        %1780 = vmatpush2.msra.mxu0 0.0
        %1781 = vmatprep.subr.mxu0 0.0
        %1782 = vmatpush2.msra.mxu0 0.0
        %1783 = vmatprep.subr.mxu0 0.0
        %1784 = vmatpush2.msra.mxu0 0.0
        %1785 = vmatprep.subr.mxu0 0.0
        %1786 = vmatpush2.msra.mxu0 0.0
        %1787 = vmatprep.subr.mxu0 0.0
        %1788 = vmatpush2.msra.mxu0 0.0
        %1789 = vmatprep.subr.mxu0 0.0
        %1790 = vmatpush2.msra.mxu0 0.0
        %1791 = vmatprep.mubr.f32.mxu0 0.0
        %1792 = vmatmul.mubr.f32.gmra.mxu0 %v1568
        %v1793 = vpop.f32.mrf.mxu0
        %v1794 = vadd.f32 %v1556, %v1793
        %v1795 = vpop.f32.mrf.mxu0
        %v1796 = vadd.f32 %v1560, %v1795
        %1797 = vmatprep.mubr.f32.mxu0 0.0
        %1798 = vmatmul.mubr.f32.gmra.mxu0 %v1571
        %v1799 = vpop.f32.mrf.mxu0
        %v1800 = vadd.f32 %v1556, %v1799
        %v1801 = vpop.f32.mrf.mxu0
        %v1802 = vadd.f32 %v1560, %v1801
        %1803 = vdwg.mxu0
        %vm1804 = vcmp.ge.f32.partialorder %v1640, 0.0
        %vm1805 = vcmp.ge.f32.partialorder %v1642, 0.0
        %vm1806 = vcmp.ge.f32.partialorder %v1717, 0.0
        %vm1807 = vcmp.ge.f32.partialorder %v1719, 0.0
        %vm1808 = vcmp.ge.f32.partialorder %v1794, 0.0
        %vm1809 = vcmp.ge.f32.partialorder %v1796, 0.0
        %vm1810 = vcmp.ge.f32.partialorder %v1646, 0.0
        %vm1811 = vcmp.ge.f32.partialorder %v1648, 0.0
        %vm1812 = vcmp.ge.f32.partialorder %v1723, 0.0
        %vm1813 = vcmp.ge.f32.partialorder %v1725, 0.0
        %vm1814 = vcmp.ge.f32.partialorder %v1800, 0.0
        %vm1815 = vcmp.ge.f32.partialorder %v1802, 0.0
        %v1816 = vmul.f32 %v1640, 0.01
        %v1817 = vmul.f32 %v1642, 0.01
        %v1818 = vmul.f32 %v1717, 0.01
        %v1819 = vmul.f32 %v1719, 0.01
        %v1820 = vmul.f32 %v1794, 0.01
        %v1821 = vmul.f32 %v1796, 0.01
        %v1822 = vmul.f32 %v1646, 0.01
        %v1823 = vmul.f32 %v1648, 0.01
        %v1824 = vmul.f32 %v1723, 0.01
        %v1825 = vmul.f32 %v1725, 0.01
        %v1826 = vmul.f32 %v1800, 0.01
        %v1827 = vmul.f32 %v1802, 0.01
        %v1828 = vsel %vm1804, %v1640, %v1816
        %v1829 = vsel %vm1805, %v1642, %v1817
        %v1830 = vsel %vm1806, %v1717, %v1818
        %v1831 = vsel %vm1807, %v1719, %v1819
        %v1832 = vsel %vm1808, %v1794, %v1820
        %v1833 = vsel %vm1809, %v1796, %v1821
        %v1834 = vsel %vm1810, %v1646, %v1822
        %v1835 = vsel %vm1811, %v1648, %v1823
        %v1836 = vsel %vm1812, %v1723, %v1824
        %v1837 = vsel %vm1813, %v1725, %v1825
        %v1838 = vsel %vm1814, %v1800, %v1826
        %v1839 = vsel %vm1815, %v1802, %v1827
        %v1840 = vld [vmem:[#allocation14] sm:$0xff]
        %v1841 = vld [vmem:[#allocation14 + $0x8] sm:$0xff]
        %v1842 = vld [vmem:[#allocation14 + $0x10] sm:$0xff]
        %v1843 = vld [vmem:[#allocation14 + $0x18] sm:$0xff]
        %v1844 = vld [vmem:[#allocation14 + $0x20] sm:$0xff]
        %v1845 = vld [vmem:[#allocation14 + $0x28] sm:$0xff]
        %v1846 = vld [vmem:[#allocation14 + $0x30] sm:$0xff]
        %v1847 = vld [vmem:[#allocation14 + $0x38] sm:$0xff]
        %v1848 = vld [vmem:[#allocation14 + $0x40] sm:$0xff]
        %v1849 = vld [vmem:[#allocation14 + $0x48] sm:$0xff]
        %v1850 = vld [vmem:[#allocation14 + $0x50] sm:$0xff]
        %v1851 = vld [vmem:[#allocation14 + $0x58] sm:$0xff]
        %v1852 = vld [vmem:[#allocation14 + $0x60] sm:$0xff]
        %v1853 = vld [vmem:[#allocation14 + $0x68] sm:$0xff]
        %v1854 = vld [vmem:[#allocation14 + $0x70] sm:$0xff]
        %v1855 = vld [vmem:[#allocation14 + $0x78] sm:$0xff]
        %v1856 = vld [vmem:[#allocation14 + $0x80] sm:$0xff]
        %v1857 = vld [vmem:[#allocation14 + $0x88] sm:$0xff]
        %v1858 = vld [vmem:[#allocation14 + $0x90] sm:$0xff]
        %v1859 = vld [vmem:[#allocation14 + $0x98] sm:$0xff]
        %v1860 = vld [vmem:[#allocation14 + $0xa0] sm:$0xff]
        %v1861 = vld [vmem:[#allocation14 + $0xa8] sm:$0xff]
        %v1862 = vld [vmem:[#allocation14 + $0xb0] sm:$0xff]
        %v1863 = vld [vmem:[#allocation14 + $0xb8] sm:$0xff]
        %v1864 = vld [vmem:[#allocation14 + $0xc0] sm:$0xff]
        %v1865 = vld [vmem:[#allocation14 + $0xc8] sm:$0xff]
        %v1866 = vld [vmem:[#allocation14 + $0xd0] sm:$0xff]
        %v1867 = vld [vmem:[#allocation14 + $0xd8] sm:$0xff]
        %v1868 = vld [vmem:[#allocation14 + $0xe0] sm:$0xff]
        %v1869 = vld [vmem:[#allocation14 + $0xe8] sm:$0xff]
        %v1870 = vld [vmem:[#allocation14 + $0xf0] sm:$0xff]
        %v1871 = vld [vmem:[#allocation14 + $0xf8] sm:$0xff]
        %v1872 = vld [vmem:[#allocation14 + $0x100] sm:$0xff]
        %v1873 = vld [vmem:[#allocation14 + $0x108] sm:$0xff]
        %v1874 = vld [vmem:[#allocation14 + $0x110] sm:$0xff]
        %v1875 = vld [vmem:[#allocation14 + $0x118] sm:$0xff]
        %v1876 = vld [vmem:[#allocation14 + $0x120] sm:$0xff]
        %v1877 = vld [vmem:[#allocation14 + $0x128] sm:$0xff]
        %v1878 = vld [vmem:[#allocation14 + $0x130] sm:$0xff]
        %v1879 = vld [vmem:[#allocation14 + $0x138] sm:$0xff]
        %v1880 = vld [vmem:[#allocation14 + $0x140] sm:$0xff]
        %v1881 = vld [vmem:[#allocation14 + $0x148] sm:$0xff]
        %v1882 = vld [vmem:[#allocation14 + $0x150] sm:$0xff]
        %v1883 = vld [vmem:[#allocation14 + $0x158] sm:$0xff]
        %v1884 = vld [vmem:[#allocation14 + $0x160] sm:$0xff]
        %v1885 = vld [vmem:[#allocation14 + $0x168] sm:$0xff]
        %v1886 = vld [vmem:[#allocation14 + $0x170] sm:$0xff]
        %v1887 = vld [vmem:[#allocation14 + $0x178] sm:$0xff]
        %v1888 = vld [vmem:[#allocation14 + $0x180] sm:$0xff]
        %v1889 = vld [vmem:[#allocation14 + $0x188] sm:$0xff]
        %v1890 = vld [vmem:[#allocation14 + $0x190] sm:$0xff]
        %v1891 = vld [vmem:[#allocation14 + $0x198] sm:$0xff]
        %v1892 = vld [vmem:[#allocation14 + $0x1a0] sm:$0xff]
        %v1893 = vld [vmem:[#allocation14 + $0x1a8] sm:$0xff]
        %v1894 = vld [vmem:[#allocation14 + $0x1b0] sm:$0xff]
        %v1895 = vld [vmem:[#allocation14 + $0x1b8] sm:$0xff]
        %v1896 = vld [vmem:[#allocation14 + $0x1c0] sm:$0xff]
        %v1897 = vld [vmem:[#allocation14 + $0x1c8] sm:$0xff]
        %v1898 = vld [vmem:[#allocation14 + $0x1d0] sm:$0xff]
        %v1899 = vld [vmem:[#allocation14 + $0x1d8] sm:$0xff]
        %v1900 = vld [vmem:[#allocation14 + $0x1e0] sm:$0xff]
        %v1901 = vld [vmem:[#allocation14 + $0x1e8] sm:$0xff]
        %v1902 = vld [vmem:[#allocation14 + $0x1f0] sm:$0xff]
        %v1903 = vld [vmem:[#allocation14 + $0x1f8] sm:$0xff]
        %v1904 = vld [vmem:[#allocation14 + $0x200] sm:$0xff]
        %v1905 = vld [vmem:[#allocation14 + $0x208] sm:$0xff]
        %v1906 = vld [vmem:[#allocation14 + $0x210] sm:$0xff]
        %v1907 = vld [vmem:[#allocation14 + $0x218] sm:$0xff]
        %v1908 = vld [vmem:[#allocation14 + $0x220] sm:$0xff]
        %v1909 = vld [vmem:[#allocation14 + $0x228] sm:$0xff]
        %v1910 = vld [vmem:[#allocation14 + $0x230] sm:$0xff]
        %v1911 = vld [vmem:[#allocation14 + $0x238] sm:$0xff]
        %v1912 = vld [vmem:[#allocation14 + $0x240] sm:$0xff]
        %v1913 = vld [vmem:[#allocation14 + $0x248] sm:$0xff]
        %v1914 = vld [vmem:[#allocation14 + $0x250] sm:$0xff]
        %v1915 = vld [vmem:[#allocation14 + $0x258] sm:$0xff]
        %v1916 = vld [vmem:[#allocation14 + $0x260] sm:$0xff]
        %v1917 = vld [vmem:[#allocation14 + $0x268] sm:$0xff]
        %v1918 = vld [vmem:[#allocation14 + $0x270] sm:$0xff]
        %v1919 = vld [vmem:[#allocation14 + $0x278] sm:$0xff]
        %v1920 = vld [vmem:[#allocation14 + $0x280] sm:$0xff]
        %v1921 = vld [vmem:[#allocation14 + $0x288] sm:$0xff]
        %v1922 = vld [vmem:[#allocation14 + $0x290] sm:$0xff]
        %v1923 = vld [vmem:[#allocation14 + $0x298] sm:$0xff]
        %v1924 = vld [vmem:[#allocation14 + $0x2a0] sm:$0xff]
        %v1925 = vld [vmem:[#allocation14 + $0x2a8] sm:$0xff]
        %v1926 = vld [vmem:[#allocation14 + $0x2b0] sm:$0xff]
        %v1927 = vld [vmem:[#allocation14 + $0x2b8] sm:$0xff]
        %v1928 = vld [vmem:[#allocation14 + $0x2c0] sm:$0xff]
        %v1929 = vld [vmem:[#allocation14 + $0x2c8] sm:$0xff]
        %v1930 = vld [vmem:[#allocation14 + $0x2d0] sm:$0xff]
        %v1931 = vld [vmem:[#allocation14 + $0x2d8] sm:$0xff]
        %v1932 = vld [vmem:[#allocation14 + $0x2e0] sm:$0xff]
        %v1933 = vld [vmem:[#allocation14 + $0x2e8] sm:$0xff]
        %v1934 = vld [vmem:[#allocation14 + $0x2f0] sm:$0xff]
        %v1935 = vld [vmem:[#allocation14 + $0x2f8] sm:$0xff]
        %1936 = vmatprep.subr.mxu0 0.0
        %1937 = vmatpush1.msra.mxu0 %v1855
        %1938 = vmatprep.subr.mxu0 0.0
        %1939 = vmatpush1.msra.mxu0 %v1854
        %1940 = vmatprep.subr.mxu0 0.0
        %1941 = vmatpush1.msra.mxu0 %v1853
        %1942 = vmatprep.subr.mxu0 0.0
        %1943 = vmatpush1.msra.mxu0 %v1852
        %1944 = vmatprep.subr.mxu0 0.0
        %1945 = vmatpush1.msra.mxu0 %v1851
        %1946 = vmatprep.subr.mxu0 0.0
        %1947 = vmatpush1.msra.mxu0 %v1850
        %1948 = vmatprep.subr.mxu0 0.0
        %1949 = vmatpush1.msra.mxu0 %v1849
        %1950 = vmatprep.subr.mxu0 0.0
        %1951 = vmatpush1.msra.mxu0 %v1848
        %1952 = vmatprep.subr.mxu0 0.0
        %1953 = vmatpush1.msra.mxu0 %v1847
        %1954 = vmatprep.subr.mxu0 0.0
        %1955 = vmatpush1.msra.mxu0 %v1846
        %1956 = vmatprep.subr.mxu0 0.0
        %1957 = vmatpush1.msra.mxu0 %v1845
        %1958 = vmatprep.subr.mxu0 0.0
        %1959 = vmatpush1.msra.mxu0 %v1844
        %1960 = vmatprep.subr.mxu0 0.0
        %1961 = vmatpush1.msra.mxu0 %v1843
        %1962 = vmatprep.subr.mxu0 0.0
        %1963 = vmatpush1.msra.mxu0 %v1842
        %1964 = vmatprep.subr.mxu0 0.0
        %1965 = vmatpush1.msra.mxu0 %v1841
        %1966 = vmatprep.subr.mxu0 0.0
        %1967 = vmatpush1.msra.mxu0 %v1840
        %1968 = vmatprep.subr.mxu0 0.0
        %1969 = vmatpush2.msra.mxu0 %v1871
        %1970 = vmatprep.subr.mxu0 0.0
        %1971 = vmatpush2.msra.mxu0 %v1870
        %1972 = vmatprep.subr.mxu0 0.0
        %1973 = vmatpush2.msra.mxu0 %v1869
        %1974 = vmatprep.subr.mxu0 0.0
        %1975 = vmatpush2.msra.mxu0 %v1868
        %1976 = vmatprep.subr.mxu0 0.0
        %1977 = vmatpush2.msra.mxu0 %v1867
        %1978 = vmatprep.subr.mxu0 0.0
        %1979 = vmatpush2.msra.mxu0 %v1866
        %1980 = vmatprep.subr.mxu0 0.0
        %1981 = vmatpush2.msra.mxu0 %v1865
        %1982 = vmatprep.subr.mxu0 0.0
        %1983 = vmatpush2.msra.mxu0 %v1864
        %1984 = vmatprep.subr.mxu0 0.0
        %1985 = vmatpush2.msra.mxu0 %v1863
        %1986 = vmatprep.subr.mxu0 0.0
        %1987 = vmatpush2.msra.mxu0 %v1862
        %1988 = vmatprep.subr.mxu0 0.0
        %1989 = vmatpush2.msra.mxu0 %v1861
        %1990 = vmatprep.subr.mxu0 0.0
        %1991 = vmatpush2.msra.mxu0 %v1860
        %1992 = vmatprep.subr.mxu0 0.0
        %1993 = vmatpush2.msra.mxu0 %v1859
        %1994 = vmatprep.subr.mxu0 0.0
        %1995 = vmatpush2.msra.mxu0 %v1858
        %1996 = vmatprep.subr.mxu0 0.0
        %1997 = vmatpush2.msra.mxu0 %v1857
        %1998 = vmatprep.subr.mxu0 0.0
        %1999 = vmatpush2.msra.mxu0 %v1856
        %2000 = vmatprep.mubr.f32.mxu0 %v1829
        %2001 = vmatmul.mubr.f32.gmra.mxu0 %v1828
        %v2002 = vpop.f32.mrf.mxu0
        %v2003 = vadd.f32 %v436, %v2002
        %v2004 = vpop.f32.mrf.mxu0
        %2005 = vmatprep.mubr.f32.mxu0 %v1835
        %2006 = vmatmul.mubr.f32.gmra.mxu0 %v1834
        %v2007 = vpop.f32.mrf.mxu0
        %v2008 = vadd.f32 %v437, %v2007
        %v2009 = vpop.f32.mrf.mxu0
        %2010 = vdwg.mxu0
        %2011 = vmatprep.subr.mxu0 0.0
        %2012 = vmatpush1.msra.mxu0 %v1887
        %2013 = vmatprep.subr.mxu0 0.0
        %2014 = vmatpush1.msra.mxu0 %v1886
        %2015 = vmatprep.subr.mxu0 0.0
        %2016 = vmatpush1.msra.mxu0 %v1885
        %2017 = vmatprep.subr.mxu0 0.0
        %2018 = vmatpush1.msra.mxu0 %v1884
        %2019 = vmatprep.subr.mxu0 0.0
        %2020 = vmatpush1.msra.mxu0 %v1883
        %2021 = vmatprep.subr.mxu0 0.0
        %2022 = vmatpush1.msra.mxu0 %v1882
        %2023 = vmatprep.subr.mxu0 0.0
        %2024 = vmatpush1.msra.mxu0 %v1881
        %2025 = vmatprep.subr.mxu0 0.0
        %2026 = vmatpush1.msra.mxu0 %v1880
        %2027 = vmatprep.subr.mxu0 0.0
        %2028 = vmatpush1.msra.mxu0 %v1879
        %2029 = vmatprep.subr.mxu0 0.0
        %2030 = vmatpush1.msra.mxu0 %v1878
        %2031 = vmatprep.subr.mxu0 0.0
        %2032 = vmatpush1.msra.mxu0 %v1877
        %2033 = vmatprep.subr.mxu0 0.0
        %2034 = vmatpush1.msra.mxu0 %v1876
        %2035 = vmatprep.subr.mxu0 0.0
        %2036 = vmatpush1.msra.mxu0 %v1875
        %2037 = vmatprep.subr.mxu0 0.0
        %2038 = vmatpush1.msra.mxu0 %v1874
        %2039 = vmatprep.subr.mxu0 0.0
        %2040 = vmatpush1.msra.mxu0 %v1873
        %2041 = vmatprep.subr.mxu0 0.0
        %2042 = vmatpush1.msra.mxu0 %v1872
        %2043 = vmatprep.subr.mxu0 0.0
        %2044 = vmatpush2.msra.mxu0 %v1903
        %2045 = vmatprep.subr.mxu0 0.0
        %2046 = vmatpush2.msra.mxu0 %v1902
        %2047 = vmatprep.subr.mxu0 0.0
        %2048 = vmatpush2.msra.mxu0 %v1901
        %2049 = vmatprep.subr.mxu0 0.0
        %2050 = vmatpush2.msra.mxu0 %v1900
        %2051 = vmatprep.subr.mxu0 0.0
        %2052 = vmatpush2.msra.mxu0 %v1899
        %2053 = vmatprep.subr.mxu0 0.0
        %2054 = vmatpush2.msra.mxu0 %v1898
        %2055 = vmatprep.subr.mxu0 0.0
        %2056 = vmatpush2.msra.mxu0 %v1897
        %2057 = vmatprep.subr.mxu0 0.0
        %2058 = vmatpush2.msra.mxu0 %v1896
        %2059 = vmatprep.subr.mxu0 0.0
        %2060 = vmatpush2.msra.mxu0 %v1895
        %2061 = vmatprep.subr.mxu0 0.0
        %2062 = vmatpush2.msra.mxu0 %v1894
        %2063 = vmatprep.subr.mxu0 0.0
        %2064 = vmatpush2.msra.mxu0 %v1893
        %2065 = vmatprep.subr.mxu0 0.0
        %2066 = vmatpush2.msra.mxu0 %v1892
        %2067 = vmatprep.subr.mxu0 0.0
        %2068 = vmatpush2.msra.mxu0 %v1891
        %2069 = vmatprep.subr.mxu0 0.0
        %2070 = vmatpush2.msra.mxu0 %v1890
        %2071 = vmatprep.subr.mxu0 0.0
        %2072 = vmatpush2.msra.mxu0 %v1889
        %2073 = vmatprep.subr.mxu0 0.0
        %2074 = vmatpush2.msra.mxu0 %v1888
        %2075 = vmatprep.mubr.f32.mxu0 %v1831
        %2076 = vmatmul.mubr.f32.gmra.mxu0 %v1830
        %v2077 = vpop.f32.mrf.mxu0
        %v2078 = vadd.f32 %v2003, %v2077
        %v2079 = vpop.f32.mrf.mxu0
        %2080 = vmatprep.mubr.f32.mxu0 %v1837
        %2081 = vmatmul.mubr.f32.gmra.mxu0 %v1836
        %v2082 = vpop.f32.mrf.mxu0
        %v2083 = vadd.f32 %v2008, %v2082
        %v2084 = vpop.f32.mrf.mxu0
        %2085 = vdwg.mxu0
        %2086 = vmatprep.subr.mxu0 0.0
        %2087 = vmatpush1.msra.mxu0 %v1919
        %2088 = vmatprep.subr.mxu0 0.0
        %2089 = vmatpush1.msra.mxu0 %v1918
        %2090 = vmatprep.subr.mxu0 0.0
        %2091 = vmatpush1.msra.mxu0 %v1917
        %2092 = vmatprep.subr.mxu0 0.0
        %2093 = vmatpush1.msra.mxu0 %v1916
        %2094 = vmatprep.subr.mxu0 0.0
        %2095 = vmatpush1.msra.mxu0 %v1915
        %2096 = vmatprep.subr.mxu0 0.0
        %2097 = vmatpush1.msra.mxu0 %v1914
        %2098 = vmatprep.subr.mxu0 0.0
        %2099 = vmatpush1.msra.mxu0 %v1913
        %2100 = vmatprep.subr.mxu0 0.0
        %2101 = vmatpush1.msra.mxu0 %v1912
        %2102 = vmatprep.subr.mxu0 0.0
        %2103 = vmatpush1.msra.mxu0 %v1911
        %2104 = vmatprep.subr.mxu0 0.0
        %2105 = vmatpush1.msra.mxu0 %v1910
        %2106 = vmatprep.subr.mxu0 0.0
        %2107 = vmatpush1.msra.mxu0 %v1909
        %2108 = vmatprep.subr.mxu0 0.0
        %2109 = vmatpush1.msra.mxu0 %v1908
        %2110 = vmatprep.subr.mxu0 0.0
        %2111 = vmatpush1.msra.mxu0 %v1907
        %2112 = vmatprep.subr.mxu0 0.0
        %2113 = vmatpush1.msra.mxu0 %v1906
        %2114 = vmatprep.subr.mxu0 0.0
        %2115 = vmatpush1.msra.mxu0 %v1905
        %2116 = vmatprep.subr.mxu0 0.0
        %2117 = vmatpush1.msra.mxu0 %v1904
        %2118 = vmatprep.subr.mxu0 0.0
        %2119 = vmatpush2.msra.mxu0 %v1935
        %2120 = vmatprep.subr.mxu0 0.0
        %2121 = vmatpush2.msra.mxu0 %v1934
        %2122 = vmatprep.subr.mxu0 0.0
        %2123 = vmatpush2.msra.mxu0 %v1933
        %2124 = vmatprep.subr.mxu0 0.0
        %2125 = vmatpush2.msra.mxu0 %v1932
        %2126 = vmatprep.subr.mxu0 0.0
        %2127 = vmatpush2.msra.mxu0 %v1931
        %2128 = vmatprep.subr.mxu0 0.0
        %2129 = vmatpush2.msra.mxu0 %v1930
        %2130 = vmatprep.subr.mxu0 0.0
        %2131 = vmatpush2.msra.mxu0 %v1929
        %2132 = vmatprep.subr.mxu0 0.0
        %2133 = vmatpush2.msra.mxu0 %v1928
        %2134 = vmatprep.subr.mxu0 0.0
        %2135 = vmatpush2.msra.mxu0 %v1927
        %2136 = vmatprep.subr.mxu0 0.0
        %2137 = vmatpush2.msra.mxu0 %v1926
        %2138 = vmatprep.subr.mxu0 0.0
        %2139 = vmatpush2.msra.mxu0 %v1925
        %2140 = vmatprep.subr.mxu0 0.0
        %2141 = vmatpush2.msra.mxu0 %v1924
        %2142 = vmatprep.subr.mxu0 0.0
        %2143 = vmatpush2.msra.mxu0 %v1923
        %2144 = vmatprep.subr.mxu0 0.0
        %2145 = vmatpush2.msra.mxu0 %v1922
        %2146 = vmatprep.subr.mxu0 0.0
        %2147 = vmatpush2.msra.mxu0 %v1921
        %2148 = vmatprep.subr.mxu0 0.0
        %2149 = vmatpush2.msra.mxu0 %v1920
        %2150 = vmatprep.mubr.f32.mxu0 %v1833
        %2151 = vmatmul.mubr.f32.gmra.mxu0 %v1832
        %v2152 = vpop.f32.mrf.mxu0
        %v2153 = vadd.f32 %v2078, %v2152
        %v2154 = vpop.f32.mrf.mxu0
        %2155 = vmatprep.mubr.f32.mxu0 %v1839
        %2156 = vmatmul.mubr.f32.gmra.mxu0 %v1838
        %v2157 = vpop.f32.mrf.mxu0
        %v2158 = vadd.f32 %v2083, %v2157
        %v2159 = vpop.f32.mrf.mxu0
        %2160 = vdwg.mxu0
        %2161 = vst [vmem:[%s433] sm:$0xff] %v2153
        %2162 = vst [vmem:[%s433 + $0x8] sm:$0xff] %v2158
        %s2163 = sand.u32 %s231, 1
        %s2164 = scalar_lea.sflag [#allocation5], %s2163
        %s2165 = sand.u32 %s231, 1
        %s2166 = smul.addr %s2165, 16
        %s2167 = scalar_lea.vmem [#allocation15], %s2166
        // Predicated region
        $region85: #{tpu_custom_call.1} parent=55 // pred_check
          %p2168 = pneg %p241
        $region86: #{tpu_custom_call.1} parent=55 // pred_check_branch
          %2170 = sbr.rel (%p2168) target = $region88
        $region87: #{tpu_custom_call.1} parent=55 // pred_region
          %s2171 = smul.u32 2, %s29
          %s2173 = ssub.s32 256, 256
          %2174 = vsyncadd %s2164, %s2173
          %s2175 = smul.addr %s2171, 128
          %s2176 = scalar_lea.hbm %s9, %s2175
          %s2177 = sshll.u32 %s2167, 4
          %s2178 = int_to_ptr.vmem [resolvable:$true] %s2177
          %2183 = dma.vmem_to_hbm [thread:$0]  %s2178, 256, %s2176, %s2164, 128, 128, 8
        $region88: #{tpu_custom_call.1} parent=55 // pred_fallthru
          _
      $region56: #{tpu_custom_call.1} parent=5 // pred_fallthru
        _
      %p2184 = scmp.le.s32.totalorder 2, %s24
      // Predicated region
      $region89: #{tpu_custom_call.1} parent=5 // pred_check
        %p2185 = pneg %p2184
      $region90: #{tpu_custom_call.1} parent=5 // pred_check_branch
        %2187 = sbr.rel (%p2185) target = $region92
      $region91: #{tpu_custom_call.1} parent=5 // pred_region
        %s2188 = ssub.s32 %s24, 2
        // Predicated region
        $region93: #{tpu_custom_call.1} parent=91 // pred_check
          %p2189 = pneg %p247
        $region94: #{tpu_custom_call.1} parent=91 // pred_check_branch
          %2191 = sbr.rel (%p2189) target = $region96
        $region95: #{tpu_custom_call.1} parent=91 // pred_region
          %s2192 = sand.u32 %s232, 1
          %s2193 = scalar_lea.sflag [#allocation5], %s2192
          %s2194 = sand.u32 %s232, 1
          %s2195 = smul.addr %s2194, 16
          %s2196 = scalar_lea.vmem [#allocation15], %s2195
          %2197 = dma.done %s2193, 256
        $region96: #{tpu_custom_call.1} parent=91 // pred_fallthru
          _
      $region92: #{tpu_custom_call.1} parent=5 // pred_fallthru
        _
    $region6: #{tpu_custom_call.1} parent=1 // loop_footer
      %s28 = sadd.s32 1, %s24
    $region7: #{tpu_custom_call.1} parent=1 // loop_footer_branch
      %23 = sbr.rel target = $region3
    $region8: #{tpu_custom_call.1} parent=1 // loop_exit
      _
    %2198 = vsyncpa [#allocation4], 1
    %s2199 = scalar_lea.sflag [#allocation4], 1
    %2200 = vsyncpa %s2199, 1
    %2201 = vsyncpa [#allocation7], 1
    %2202 = vsyncpa [#allocation10], 1
    %2203 = vsyncpa [#allocation13], 1
    %2204 = vsyncpa [#allocation5], 1
    %s2205 = scalar_lea.sflag [#allocation5], 1
    %2206 = vsyncpa %s2205, 1

</llo_original>
